<compile_context>
chip_gen: v7x
topology: tpu7x:2x2x1
jax: 0.10.0
libtpu: 0.0.40
codegen_flags: <defaults>
</compile_context>

<pallas_src>
import jax
import jax.numpy as jnp
import numpy as np
from jax.experimental import pallas as pl
from jax.experimental.pallas import tpu as pltpu

K = 6          # Conv1d kernel_size
PAD = 1        # Conv1d padding
N_LAYERS = 4
C_LANE = 128   # lane-padded channel width
C_OUT = 80     # real output channels per conv layer


def make_fused_kernel(L0):
    """Build the fused 4-layer kernel for input length L0 (static)."""
    # each layer shrinks L by (K - 1 - 2*PAD) = 3
    l_outs = [L0 - 3 * (i + 1) for i in range(N_LAYERS)]
    L_pad0 = L0 + 2 * PAD

    def kernel(x_ref, w_ref, b_ref, u_ref, act_ref):
        # x_ref  : (L_pad0, 128) f32   length+channel padded layer-1 input
        # w_ref  : (4, K*128, 128) bf16  im2col weights, one slab per layer
        # b_ref  : (4, 128) f32          lane-padded biases
        # u_ref  : (4, 128) f32          max-over-time per layer (lane dense)
        # act_ref: (L_pad0, 128) f32     VMEM-resident activations
        act_ref[...] = x_ref[...]
        b_all = b_ref[...]                                      # (4, 128)

        for layer, l_out in enumerate(l_outs):
            # im2col patch (l_out, K*128): one bf16 MXU matmul per layer.
            patch = jnp.concatenate(
                [act_ref[k:k + l_out, :] for k in range(K)], axis=1)
            acc = jnp.dot(patch.astype(jnp.bfloat16), w_ref[layer],
                          preferred_element_type=jnp.float32)   # (l_out, 128)
            y = jnp.maximum(acc + b_all[layer:layer + 1, :], 0.0)
            # max over time -> lane-dense (1, 128) store
            u_ref[layer:layer + 1, :] = jnp.max(y, axis=0, keepdims=True)
            if layer + 1 < N_LAYERS:
                # re-pad in VMEM for the next layer (zero rows = conv padding)
                act_ref[...] = jnp.zeros_like(act_ref)
                act_ref[PAD:PAD + l_out, :] = y

    return kernel, L_pad0


def convnet_encoder4_forward(sent, params):
    """sent: (seq_len, batch, word_emb_dim) -- same convention as PyTorch.

    Returns emb: (batch, 4 * 80) == torch.cat((u1, u2, u3, u4), 1).
    """
    L0, B, C_in = sent.shape
    if L0 < 13:
        raise ValueError("seq_len must be >= 13 (each conv layer shrinks L by 3)")

    # NLC layout; pad length for layer 1 and channels to 128 lanes (one-time, tiny).
    x = jnp.transpose(sent, (1, 0, 2))                            # (B, L, C)
    x = jnp.pad(x, ((0, 0), (PAD, PAD), (0, C_LANE - C_in)))      # (B, L+2, 128)
    x = x.astype(jnp.float32)

    # im2col weights, lane-padded, stacked over layers: (4, K*128, 128) bf16
    w_list, b_list = [], []
    for (w, b) in params:                                         # w: (80, Cin, K)
        c_out, c_in, _ = w.shape
        wk = jnp.transpose(w, (2, 1, 0))                          # (K, Cin, Cout)
        wk = jnp.pad(wk, ((0, 0), (0, C_LANE - c_in), (0, C_LANE - c_out)))
        w_list.append(wk.reshape(K * C_LANE, C_LANE))
        b_list.append(jnp.pad(b, (0, C_LANE - c_out)))
    w_all = jnp.stack(w_list).astype(jnp.bfloat16)                # (4, 768, 128)
    b_all = jnp.stack(b_list).astype(jnp.float32)                 # (4, 128)

    kernel, L_pad0 = make_fused_kernel(L0)

    u_all = pl.pallas_call(
        kernel,
        out_shape=jax.ShapeDtypeStruct((B, N_LAYERS, C_LANE), jnp.float32),
        grid=(B,),
        in_specs=[
            pl.BlockSpec((None, L_pad0, C_LANE), lambda b: (b, 0, 0)),
            pl.BlockSpec((N_LAYERS, K * C_LANE, C_LANE), lambda b: (0, 0, 0)),
            pl.BlockSpec((N_LAYERS, C_LANE), lambda b: (0, 0)),
        ],
        out_specs=pl.BlockSpec((None, N_LAYERS, C_LANE), lambda b: (b, 0, 0)),
        scratch_shapes=[pltpu.VMEM((L_pad0, C_LANE), jnp.float32)],
        compiler_params=pltpu.CompilerParams(
            dimension_semantics=("parallel",)),
    )(x, w_all, b_all)

    # (B, 4, 128) -> keep the real 80 channels, layer-major concat -> (B, 320)
    return u_all[:, :, :C_OUT].reshape(B, N_LAYERS * C_OUT)


def init_params(key, word_emb_dim):
    """Deterministic synthetic init matching nn.Conv1d parameter shapes."""
    shapes = [(C_OUT, word_emb_dim, K)] + [(C_OUT, C_OUT, K)] * 3
    params = []
    for i, shp in enumerate(shapes):
        kw, kb = jax.random.split(jax.random.fold_in(key, i))
        fan_in = shp[1] * shp[2]
        scale = 1.0 / np.sqrt(fan_in)
        w = jax.random.uniform(kw, shp, jnp.float32, -scale, scale)
        b = jax.random.uniform(kb, (shp[0],), jnp.float32, -scale, scale)
        params.append((w, b))
    return params


def reference_forward(sent, params):
    """Pure-JAX (lax.conv, f32) reference of the PyTorch forward."""
    x = jnp.transpose(sent, (1, 2, 0))  # (B, C, L), NCW like torch
    us = []
    for (w, b) in params:
        x = jax.lax.conv_general_dilated(
            x, w, window_strides=(1,), padding=[(PAD, PAD)],
            dimension_numbers=("NCH", "OIH", "NCH"))
        x = jnp.maximum(x + b[None, :, None], 0.0)
        us.append(jnp.max(x, axis=2))
    return jnp.concatenate(us, axis=1)


if __name__ == "__main__":
    config = dict(bsize=2, word_emb_dim=32, enc_lstm_dim=32, pool_type="max")
    seq_len, batch = 16, config["bsize"]

    key = jax.random.PRNGKey(0)
    k_in, k_p = jax.random.split(key)
    sent = jax.random.normal(k_in, (seq_len, batch, config["word_emb_dim"]),
                             jnp.float32)
    sent_len = jnp.full((batch,), seq_len, jnp.int32)  # parity with torch API; unused
    params = init_params(k_p, config["word_emb_dim"])

    fwd = jax.jit(convnet_encoder4_forward)
    emb = jax.block_until_ready(fwd(sent, params))
    ref = jax.block_until_ready(reference_forward(sent, params))

    assert emb.shape == (batch, N_LAYERS * C_OUT), emb.shape
    # bf16 MXU operands (f32 accumulation) -> slightly looser tolerance than pure f32
    err = np.max(np.abs(np.asarray(emb) - np.asarray(ref)))
    assert np.allclose(np.asarray(emb), np.asarray(ref), atol=5e-2, rtol=5e-2), err

    print("KERNEL_OK")
</pallas_src>

<mosaic_0001>
module attributes {stable_mosaic.version = 11 : i64} {
  func.func @kernel(%arg0: i32, %arg1: memref<1x18x128xf32, #tpu.memory_space<vmem>>, %arg2: memref<4x768x128xbf16, #tpu.memory_space<vmem>>, %arg3: memref<4x128xf32, #tpu.memory_space<vmem>>, %arg4: memref<1x4x128xf32, #tpu.memory_space<vmem>>, %arg5: memref<18x128xf32, #tpu.memory_space<vmem>>) attributes {dimension_semantics = [#tpu.dimension_semantics<parallel>], iteration_bounds = array<i64: 2>, scalar_prefetch = 0 : i64, scratch_operands = 1 : i64, tpu.core_type = #tpu.core_type<tc>, window_params = [{transform_indices = @transform_0, window_bounds = array<i64: 1, 18, 128>}, {pipeline_mode = #tpu.pipeline_mode<synchronous>, transform_indices = @transform_1, window_bounds = array<i64: 4, 768, 128>}, {pipeline_mode = #tpu.pipeline_mode<synchronous>, transform_indices = @transform_2, window_bounds = array<i64: 4, 128>}, {transform_indices = @transform_3, window_bounds = array<i64: 1, 4, 128>}]} {
    %c0 = arith.constant 0 : index
    %c0_0 = arith.constant 0 : index
    %c0_1 = arith.constant 0 : index
    %0 = vector.load %arg1[%c0, %c0_0, %c0_1] : memref<1x18x128xf32, #tpu.memory_space<vmem>>, vector<1x18x128xf32>
    %1 = vector.shape_cast %0 : vector<1x18x128xf32> to vector<18x128xf32>
    %c0_2 = arith.constant 0 : index
    %c0_3 = arith.constant 0 : index
    %2 = vector.load %arg5[%c0_2, %c0_3] : memref<18x128xf32, #tpu.memory_space<vmem>>, vector<18x128xf32>
    tpu.vector_store %arg5[%c0_2, %c0_3], %1 {strides = array<i32>} : memref<18x128xf32, #tpu.memory_space<vmem>>, vector<18x128xf32>,
    %c0_4 = arith.constant 0 : index
    %c0_5 = arith.constant 0 : index
    %3 = vector.load %arg3[%c0_4, %c0_5] : memref<4x128xf32, #tpu.memory_space<vmem>>, vector<4x128xf32>
    %c0_6 = arith.constant 0 : index
    %c0_7 = arith.constant 0 : index
    %4 = vector.load %arg5[%c0_6, %c0_7] : memref<18x128xf32, #tpu.memory_space<vmem>>, vector<13x128xf32>
    %c1 = arith.constant 1 : index
    %c0_8 = arith.constant 0 : index
    %5 = vector.load %arg5[%c1, %c0_8] : memref<18x128xf32, #tpu.memory_space<vmem>>, vector<13x128xf32>
    %c2 = arith.constant 2 : index
    %c0_9 = arith.constant 0 : index
    %6 = vector.load %arg5[%c2, %c0_9] : memref<18x128xf32, #tpu.memory_space<vmem>>, vector<13x128xf32>
    %c3 = arith.constant 3 : index
    %c0_10 = arith.constant 0 : index
    %7 = vector.load %arg5[%c3, %c0_10] : memref<18x128xf32, #tpu.memory_space<vmem>>, vector<13x128xf32>
    %c4 = arith.constant 4 : index
    %c0_11 = arith.constant 0 : index
    %8 = vector.load %arg5[%c4, %c0_11] : memref<18x128xf32, #tpu.memory_space<vmem>>, vector<13x128xf32>
    %c5 = arith.constant 5 : index
    %c0_12 = arith.constant 0 : index
    %9 = vector.load %arg5[%c5, %c0_12] : memref<18x128xf32, #tpu.memory_space<vmem>>, vector<13x128xf32>
    %10 = tpu.concatenate %4, %5, %6, %7, %8, %9 in 1 : vector<13x128xf32>, vector<13x128xf32>, vector<13x128xf32>, vector<13x128xf32>, vector<13x128xf32>, vector<13x128xf32> -> vector<13x768xf32>
    %11 = arith.truncf %10 : vector<13x768xf32> to vector<13x768xbf16>
    %c0_13 = arith.constant 0 : index
    %c0_14 = arith.constant 0 : index
    %c0_15 = arith.constant 0 : index
    %12 = vector.load %arg2[%c0_13, %c0_14, %c0_15] : memref<4x768x128xbf16, #tpu.memory_space<vmem>>, vector<1x768x128xbf16>
    %13 = vector.shape_cast %12 : vector<1x768x128xbf16> to vector<768x128xbf16>
    %cst = arith.constant dense<0.000000e+00> : vector<13x128xf32>
    %14 = tpu.matmul %11, %13, %cst {dimension_numbers = #tpu.dot_dimension_numbers<[1], [0], [0], [1], [0, 0, 1, 1], [], []>} : vector<13x768xbf16>, vector<768x128xbf16>, vector<13x128xf32> -> vector<13x128xf32>
    %15 = vector.extract_strided_slice %3 {offsets = [0, 0], sizes = [1, 128], strides = [1, 1]} : vector<4x128xf32> to vector<1x128xf32>
    %16 = vector.broadcast %15 : vector<1x128xf32> to vector<13x128xf32>
    %17 = arith.addf %14, %16 : vector<13x128xf32>
    %cst_16 = arith.constant 0.000000e+00 : f32
    %18 = vector.broadcast %cst_16 : f32 to vector<13x128xf32>
    %19 = arith.maximumf %17, %18 : vector<13x128xf32>
    %cst_17 = arith.constant dense<0xFF800000> : vector<128xf32>
    %20 = vector.multi_reduction <maximumf>, %19, %cst_17 [0] : vector<13x128xf32> to vector<128xf32>
    %21 = vector.shape_cast %20 : vector<128xf32> to vector<1x128xf32>
    %c0_18 = arith.constant 0 : index
    %c0_19 = arith.constant 0 : index
    %c0_20 = arith.constant 0 : index
    %22 = vector.load %arg4[%c0_18, %c0_19, %c0_20] : memref<1x4x128xf32, #tpu.memory_space<vmem>>, vector<1x1x128xf32>
    %23 = vector.shape_cast %22 : vector<1x1x128xf32> to vector<1x128xf32>
    %24 = vector.shape_cast %21 : vector<1x128xf32> to vector<1x1x128xf32>
    tpu.vector_store %arg4[%c0_18, %c0_19, %c0_20], %24 {strides = array<i32>} : memref<1x4x128xf32, #tpu.memory_space<vmem>>, vector<1x1x128xf32>,
    %cst_21 = arith.constant 0.000000e+00 : f32
    %25 = vector.broadcast %cst_21 : f32 to vector<18x128xf32>
    %c0_22 = arith.constant 0 : index
    %c0_23 = arith.constant 0 : index
    %26 = vector.load %arg5[%c0_22, %c0_23] : memref<18x128xf32, #tpu.memory_space<vmem>>, vector<18x128xf32>
    tpu.vector_store %arg5[%c0_22, %c0_23], %25 {strides = array<i32>} : memref<18x128xf32, #tpu.memory_space<vmem>>, vector<18x128xf32>,
    %c1_24 = arith.constant 1 : index
    %c0_25 = arith.constant 0 : index
    %27 = vector.load %arg5[%c1_24, %c0_25] : memref<18x128xf32, #tpu.memory_space<vmem>>, vector<13x128xf32>
    tpu.vector_store %arg5[%c1_24, %c0_25], %19 {strides = array<i32>} : memref<18x128xf32, #tpu.memory_space<vmem>>, vector<13x128xf32>,
    %c0_26 = arith.constant 0 : index
    %c0_27 = arith.constant 0 : index
    %28 = vector.load %arg5[%c0_26, %c0_27] : memref<18x128xf32, #tpu.memory_space<vmem>>, vector<10x128xf32>
    %c1_28 = arith.constant 1 : index
    %c0_29 = arith.constant 0 : index
    %29 = vector.load %arg5[%c1_28, %c0_29] : memref<18x128xf32, #tpu.memory_space<vmem>>, vector<10x128xf32>
    %c2_30 = arith.constant 2 : index
    %c0_31 = arith.constant 0 : index
    %30 = vector.load %arg5[%c2_30, %c0_31] : memref<18x128xf32, #tpu.memory_space<vmem>>, vector<10x128xf32>
    %c3_32 = arith.constant 3 : index
    %c0_33 = arith.constant 0 : index
    %31 = vector.load %arg5[%c3_32, %c0_33] : memref<18x128xf32, #tpu.memory_space<vmem>>, vector<10x128xf32>
    %c4_34 = arith.constant 4 : index
    %c0_35 = arith.constant 0 : index
    %32 = vector.load %arg5[%c4_34, %c0_35] : memref<18x128xf32, #tpu.memory_space<vmem>>, vector<10x128xf32>
    %c5_36 = arith.constant 5 : index
    %c0_37 = arith.constant 0 : index
    %33 = vector.load %arg5[%c5_36, %c0_37] : memref<18x128xf32, #tpu.memory_space<vmem>>, vector<10x128xf32>
    %34 = tpu.concatenate %28, %29, %30, %31, %32, %33 in 1 : vector<10x128xf32>, vector<10x128xf32>, vector<10x128xf32>, vector<10x128xf32>, vector<10x128xf32>, vector<10x128xf32> -> vector<10x768xf32>
    %35 = arith.truncf %34 : vector<10x768xf32> to vector<10x768xbf16>
    %c1_38 = arith.constant 1 : index
    %c0_39 = arith.constant 0 : index
    %c0_40 = arith.constant 0 : index
    %36 = vector.load %arg2[%c1_38, %c0_39, %c0_40] : memref<4x768x128xbf16, #tpu.memory_space<vmem>>, vector<1x768x128xbf16>
    %37 = vector.shape_cast %36 : vector<1x768x128xbf16> to vector<768x128xbf16>
    %cst_41 = arith.constant dense<0.000000e+00> : vector<10x128xf32>
    %38 = tpu.matmul %35, %37, %cst_41 {dimension_numbers = #tpu.dot_dimension_numbers<[1], [0], [0], [1], [0, 0, 1, 1], [], []>} : vector<10x768xbf16>, vector<768x128xbf16>, vector<10x128xf32> -> vector<10x128xf32>
    %39 = vector.extract_strided_slice %3 {offsets = [1, 0], sizes = [1, 128], strides = [1, 1]} : vector<4x128xf32> to vector<1x128xf32>
    %40 = vector.broadcast %39 : vector<1x128xf32> to vector<10x128xf32>
    %41 = arith.addf %38, %40 : vector<10x128xf32>
    %cst_42 = arith.constant 0.000000e+00 : f32
    %42 = vector.broadcast %cst_42 : f32 to vector<10x128xf32>
    %43 = arith.maximumf %41, %42 : vector<10x128xf32>
    %cst_43 = arith.constant dense<0xFF800000> : vector<128xf32>
    %44 = vector.multi_reduction <maximumf>, %43, %cst_43 [0] : vector<10x128xf32> to vector<128xf32>
    %45 = vector.shape_cast %44 : vector<128xf32> to vector<1x128xf32>
    %c0_44 = arith.constant 0 : index
    %c1_45 = arith.constant 1 : index
    %c0_46 = arith.constant 0 : index
    %46 = vector.load %arg4[%c0_44, %c1_45, %c0_46] : memref<1x4x128xf32, #tpu.memory_space<vmem>>, vector<1x1x128xf32>
    %47 = vector.shape_cast %46 : vector<1x1x128xf32> to vector<1x128xf32>
    %48 = vector.shape_cast %45 : vector<1x128xf32> to vector<1x1x128xf32>
    tpu.vector_store %arg4[%c0_44, %c1_45, %c0_46], %48 {strides = array<i32>} : memref<1x4x128xf32, #tpu.memory_space<vmem>>, vector<1x1x128xf32>,
    %cst_47 = arith.constant 0.000000e+00 : f32
    %49 = vector.broadcast %cst_47 : f32 to vector<18x128xf32>
    %c0_48 = arith.constant 0 : index
    %c0_49 = arith.constant 0 : index
    %50 = vector.load %arg5[%c0_48, %c0_49] : memref<18x128xf32, #tpu.memory_space<vmem>>, vector<18x128xf32>
    tpu.vector_store %arg5[%c0_48, %c0_49], %49 {strides = array<i32>} : memref<18x128xf32, #tpu.memory_space<vmem>>, vector<18x128xf32>,
    %c1_50 = arith.constant 1 : index
    %c0_51 = arith.constant 0 : index
    %51 = vector.load %arg5[%c1_50, %c0_51] : memref<18x128xf32, #tpu.memory_space<vmem>>, vector<10x128xf32>
    tpu.vector_store %arg5[%c1_50, %c0_51], %43 {strides = array<i32>} : memref<18x128xf32, #tpu.memory_space<vmem>>, vector<10x128xf32>,
    %c0_52 = arith.constant 0 : index
    %c0_53 = arith.constant 0 : index
    %52 = vector.load %arg5[%c0_52, %c0_53] : memref<18x128xf32, #tpu.memory_space<vmem>>, vector<7x128xf32>
    %c1_54 = arith.constant 1 : index
    %c0_55 = arith.constant 0 : index
    %53 = vector.load %arg5[%c1_54, %c0_55] : memref<18x128xf32, #tpu.memory_space<vmem>>, vector<7x128xf32>
    %c2_56 = arith.constant 2 : index
    %c0_57 = arith.constant 0 : index
    %54 = vector.load %arg5[%c2_56, %c0_57] : memref<18x128xf32, #tpu.memory_space<vmem>>, vector<7x128xf32>
    %c3_58 = arith.constant 3 : index
    %c0_59 = arith.constant 0 : index
    %55 = vector.load %arg5[%c3_58, %c0_59] : memref<18x128xf32, #tpu.memory_space<vmem>>, vector<7x128xf32>
    %c4_60 = arith.constant 4 : index
    %c0_61 = arith.constant 0 : index
    %56 = vector.load %arg5[%c4_60, %c0_61] : memref<18x128xf32, #tpu.memory_space<vmem>>, vector<7x128xf32>
    %c5_62 = arith.constant 5 : index
    %c0_63 = arith.constant 0 : index
    %57 = vector.load %arg5[%c5_62, %c0_63] : memref<18x128xf32, #tpu.memory_space<vmem>>, vector<7x128xf32>
    %58 = tpu.concatenate %52, %53, %54, %55, %56, %57 in 1 : vector<7x128xf32>, vector<7x128xf32>, vector<7x128xf32>, vector<7x128xf32>, vector<7x128xf32>, vector<7x128xf32> -> vector<7x768xf32>
    %59 = arith.truncf %58 : vector<7x768xf32> to vector<7x768xbf16>
    %c2_64 = arith.constant 2 : index
    %c0_65 = arith.constant 0 : index
    %c0_66 = arith.constant 0 : index
    %60 = vector.load %arg2[%c2_64, %c0_65, %c0_66] : memref<4x768x128xbf16, #tpu.memory_space<vmem>>, vector<1x768x128xbf16>
    %61 = vector.shape_cast %60 : vector<1x768x128xbf16> to vector<768x128xbf16>
    %cst_67 = arith.constant dense<0.000000e+00> : vector<7x128xf32>
    %62 = tpu.matmul %59, %61, %cst_67 {dimension_numbers = #tpu.dot_dimension_numbers<[1], [0], [0], [1], [0, 0, 1, 1], [], []>} : vector<7x768xbf16>, vector<768x128xbf16>, vector<7x128xf32> -> vector<7x128xf32>
    %63 = vector.extract_strided_slice %3 {offsets = [2, 0], sizes = [1, 128], strides = [1, 1]} : vector<4x128xf32> to vector<1x128xf32>
    %64 = vector.broadcast %63 : vector<1x128xf32> to vector<7x128xf32>
    %65 = arith.addf %62, %64 : vector<7x128xf32>
    %cst_68 = arith.constant 0.000000e+00 : f32
    %66 = vector.broadcast %cst_68 : f32 to vector<7x128xf32>
    %67 = arith.maximumf %65, %66 : vector<7x128xf32>
    %cst_69 = arith.constant dense<0xFF800000> : vector<128xf32>
    %68 = vector.multi_reduction <maximumf>, %67, %cst_69 [0] : vector<7x128xf32> to vector<128xf32>
    %69 = vector.shape_cast %68 : vector<128xf32> to vector<1x128xf32>
    %c0_70 = arith.constant 0 : index
    %c2_71 = arith.constant 2 : index
    %c0_72 = arith.constant 0 : index
    %70 = vector.load %arg4[%c0_70, %c2_71, %c0_72] : memref<1x4x128xf32, #tpu.memory_space<vmem>>, vector<1x1x128xf32>
    %71 = vector.shape_cast %70 : vector<1x1x128xf32> to vector<1x128xf32>
    %72 = vector.shape_cast %69 : vector<1x128xf32> to vector<1x1x128xf32>
    tpu.vector_store %arg4[%c0_70, %c2_71, %c0_72], %72 {strides = array<i32>} : memref<1x4x128xf32, #tpu.memory_space<vmem>>, vector<1x1x128xf32>,
    %cst_73 = arith.constant 0.000000e+00 : f32
    %73 = vector.broadcast %cst_73 : f32 to vector<18x128xf32>
    %c0_74 = arith.constant 0 : index
    %c0_75 = arith.constant 0 : index
    %74 = vector.load %arg5[%c0_74, %c0_75] : memref<18x128xf32, #tpu.memory_space<vmem>>, vector<18x128xf32>
    tpu.vector_store %arg5[%c0_74, %c0_75], %73 {strides = array<i32>} : memref<18x128xf32, #tpu.memory_space<vmem>>, vector<18x128xf32>,
    %c1_76 = arith.constant 1 : index
    %c0_77 = arith.constant 0 : index
    %75 = vector.load %arg5[%c1_76, %c0_77] : memref<18x128xf32, #tpu.memory_space<vmem>>, vector<7x128xf32>
    tpu.vector_store %arg5[%c1_76, %c0_77], %67 {strides = array<i32>} : memref<18x128xf32, #tpu.memory_space<vmem>>, vector<7x128xf32>,
    %c0_78 = arith.constant 0 : index
    %c0_79 = arith.constant 0 : index
    %76 = vector.load %arg5[%c0_78, %c0_79] : memref<18x128xf32, #tpu.memory_space<vmem>>, vector<4x128xf32>
    %c1_80 = arith.constant 1 : index
    %c0_81 = arith.constant 0 : index
    %77 = vector.load %arg5[%c1_80, %c0_81] : memref<18x128xf32, #tpu.memory_space<vmem>>, vector<4x128xf32>
    %c2_82 = arith.constant 2 : index
    %c0_83 = arith.constant 0 : index
    %78 = vector.load %arg5[%c2_82, %c0_83] : memref<18x128xf32, #tpu.memory_space<vmem>>, vector<4x128xf32>
    %c3_84 = arith.constant 3 : index
    %c0_85 = arith.constant 0 : index
    %79 = vector.load %arg5[%c3_84, %c0_85] : memref<18x128xf32, #tpu.memory_space<vmem>>, vector<4x128xf32>
    %c4_86 = arith.constant 4 : index
    %c0_87 = arith.constant 0 : index
    %80 = vector.load %arg5[%c4_86, %c0_87] : memref<18x128xf32, #tpu.memory_space<vmem>>, vector<4x128xf32>
    %c5_88 = arith.constant 5 : index
    %c0_89 = arith.constant 0 : index
    %81 = vector.load %arg5[%c5_88, %c0_89] : memref<18x128xf32, #tpu.memory_space<vmem>>, vector<4x128xf32>
    %82 = tpu.concatenate %76, %77, %78, %79, %80, %81 in 1 : vector<4x128xf32>, vector<4x128xf32>, vector<4x128xf32>, vector<4x128xf32>, vector<4x128xf32>, vector<4x128xf32> -> vector<4x768xf32>
    %83 = arith.truncf %82 : vector<4x768xf32> to vector<4x768xbf16>
    %c3_90 = arith.constant 3 : index
    %c0_91 = arith.constant 0 : index
    %c0_92 = arith.constant 0 : index
    %84 = vector.load %arg2[%c3_90, %c0_91, %c0_92] : memref<4x768x128xbf16, #tpu.memory_space<vmem>>, vector<1x768x128xbf16>
    %85 = vector.shape_cast %84 : vector<1x768x128xbf16> to vector<768x128xbf16>
    %cst_93 = arith.constant dense<0.000000e+00> : vector<4x128xf32>
    %86 = tpu.matmul %83, %85, %cst_93 {dimension_numbers = #tpu.dot_dimension_numbers<[1], [0], [0], [1], [0, 0, 1, 1], [], []>} : vector<4x768xbf16>, vector<768x128xbf16>, vector<4x128xf32> -> vector<4x128xf32>
    %87 = vector.extract_strided_slice %3 {offsets = [3, 0], sizes = [1, 128], strides = [1, 1]} : vector<4x128xf32> to vector<1x128xf32>
    %88 = vector.broadcast %87 : vector<1x128xf32> to vector<4x128xf32>
    %89 = arith.addf %86, %88 : vector<4x128xf32>
    %cst_94 = arith.constant 0.000000e+00 : f32
    %90 = vector.broadcast %cst_94 : f32 to vector<4x128xf32>
    %91 = arith.maximumf %89, %90 : vector<4x128xf32>
    %cst_95 = arith.constant dense<0xFF800000> : vector<128xf32>
    %92 = vector.multi_reduction <maximumf>, %91, %cst_95 [0] : vector<4x128xf32> to vector<128xf32>
    %93 = vector.shape_cast %92 : vector<128xf32> to vector<1x128xf32>
    %c0_96 = arith.constant 0 : index
    %c3_97 = arith.constant 3 : index
    %c0_98 = arith.constant 0 : index
    %94 = vector.load %arg4[%c0_96, %c3_97, %c0_98] : memref<1x4x128xf32, #tpu.memory_space<vmem>>, vector<1x1x128xf32>
    %95 = vector.shape_cast %94 : vector<1x1x128xf32> to vector<1x128xf32>
    %96 = vector.shape_cast %93 : vector<1x128xf32> to vector<1x1x128xf32>
    tpu.vector_store %arg4[%c0_96, %c3_97, %c0_98], %96 {strides = array<i32>} : memref<1x4x128xf32, #tpu.memory_space<vmem>>, vector<1x1x128xf32>,
    return
  }
  func.func @transform_0(%arg0: i32) -> (i32, i32, i32) {
    %c0_i32 = arith.constant 0 : i32
    %c0_i32_0 = arith.constant 0 : i32
    %c0_i32_1 = arith.constant 0 : i32
    return %arg0, %c0_i32, %c0_i32_0 : i32, i32, i32
  }
  func.func @transform_1(%arg0: i32) -> (i32, i32, i32) {
    %c0_i32 = arith.constant 0 : i32
    %c0_i32_0 = arith.constant 0 : i32
    %c0_i32_1 = arith.constant 0 : i32
    %c0_i32_2 = arith.constant 0 : i32
    return %c0_i32, %c0_i32_0, %c0_i32_1 : i32, i32, i32
  }
  func.func @transform_2(%arg0: i32) -> (i32, i32) {
    %c0_i32 = arith.constant 0 : i32
    %c0_i32_0 = arith.constant 0 : i32
    %c0_i32_1 = arith.constant 0 : i32
    return %c0_i32, %c0_i32_0 : i32, i32
  }
  func.func @transform_3(%arg0: i32) -> (i32, i32, i32) {
    %c0_i32 = arith.constant 0 : i32
    %c0_i32_0 = arith.constant 0 : i32
    %c0_i32_1 = arith.constant 0 : i32
    return %arg0, %c0_i32, %c0_i32_0 : i32, i32, i32
  }
}

</mosaic_0001>

<llo_original>
// kernel: convnet_encoder4_forward.1
$region0: #{convnet_encoder4_forward.1}
  #allocation0 [shape = 'u32[]', space=smem, size = 0x4, offset = 0x4, fixed_abs, tag = 'smem constant byte address 0x4 - core index']
  #allocation1 [shape = 'u32[144,128]{1,0:T(1,128)}', space=vmem, size = 0x12000, scoped, tag = 'internal scratch']
  #allocation2 [shape = 'f32[18,128]{1,0:T(8,128)}', space=vmem, size = 0x3000, scoped, tag = 'scratch operand']
  %s0 = inlined_call_operand.vmem [shape: f32[2,18,128], index: 0, kind: input, shape index: {}]
  %s1 = inlined_call_operand.vmem [shape: bf16[4,768,128], index: 1, kind: input, shape index: {}]
  %s2 = inlined_call_operand.vmem [shape: f32[4,128], index: 2, kind: input, shape index: {}]
  %s3 = inlined_call_operand.vmem [shape: f32[2,4,128], index: 3, kind: output, shape index: {}]
  %s4 = sld [smem:[#allocation0]]
  $region45: #{convnet_encoder4_forward.1} parent=0
    _
  %s6 = ssub.s32 1, %s4
  %s7 = scalar_select 0, %s6, %s4
  loop: start=0, step=1, limit=4
  $region2: #{convnet_encoder4_forward.1} parent=0 // loop_pre_header
    _
  $region3: #{convnet_encoder4_forward.1} parent=0 // loop_header
    %s9 = sphi 0, %s13
    %p10 = scmp.ge.s32.totalorder %s9, 4
    %s19 = sphi 0, %s21
    %s22 = sphi 0, %s19
    %s23 = sphi 0, %s22
    %s39 = sphi 0, %s23
    %s43 = sphi 0, %s43
    %s45 = sphi 0, %s43
    %s46 = sphi 0, %s45
    %s60 = sphi 0, %s46
    %s64 = sphi 0, %s64
    %s66 = sphi 0, %s64
    %s67 = sphi 0, %s66
    %s81 = sphi 0, %s67
    %s87 = sphi 0, %s89
    %s90 = sphi 0, %s87
    %s91 = sphi 0, %s90
    %s107 = sphi 0, %s91
  $region4: #{convnet_encoder4_forward.1} parent=0 // loop_header_branch
    %12 = sbr.rel (%p10) target = $region8
  $region5: #{convnet_encoder4_forward.1} parent=0 // loop_body
    %s14 = ssub.s32 %s9, 1
    %s15 = ssub.s32 %s9, 2
    %s16 = sadd.s32 %s9, 1
    %s17 = ssub.s32 %s9, %s16
    %p18 = scmp.eq.s32.totalorder %s17, 0
    %s20 = sadd.s32 %s19, 1
    %s21 = scalar_select %p18, %s19, %s20
    %p24 = pneg %p18
    %p25 = scmp.eq.s32.totalorder %s9, 1
    %p26 = por %p24, %p25
    %p27 = scmp.ne.s32.totalorder %s19, %s22
    %p28 = scmp.eq.s32.totalorder %s9, 0
    %p29 = por %p27, %p28
    %p30 = scmp.ne.s32.totalorder %s19, %s22
    %p31 = scmp.eq.s32.totalorder %s14, 1
    %p32 = por %p30, %p31
    %p33 = scmp.ne.s32.totalorder %s22, %s23
    %p34 = scmp.eq.s32.totalorder %s14, 0
    %p35 = por %p33, %p34
    %p36 = scmp.ne.s32.totalorder %s22, %s23
    %p37 = scmp.eq.s32.totalorder %s15, 1
    %p38 = por %p36, %p37
    %p40 = scmp.ne.s32.totalorder %s23, %s39
    %p41 = scmp.eq.s32.totalorder %s15, 0
    %p42 = por %p40, %p41
    %s44 = sadd.s32 %s43, 1
    %p47 = scmp.eq.s32.totalorder %s9, 1
    %p48 = scmp.ne.s32.totalorder %s43, %s45
    %p49 = scmp.eq.s32.totalorder %s9, 0
    %p50 = por %p48, %p49
    %p51 = scmp.ne.s32.totalorder %s43, %s45
    %p52 = scmp.eq.s32.totalorder %s14, 1
    %p53 = por %p51, %p52
    %p54 = scmp.ne.s32.totalorder %s45, %s46
    %p55 = scmp.eq.s32.totalorder %s14, 0
    %p56 = por %p54, %p55
    %p57 = scmp.ne.s32.totalorder %s45, %s46
    %p58 = scmp.eq.s32.totalorder %s15, 1
    %p59 = por %p57, %p58
    %p61 = scmp.ne.s32.totalorder %s46, %s60
    %p62 = scmp.eq.s32.totalorder %s15, 0
    %p63 = por %p61, %p62
    %s65 = sadd.s32 %s64, 1
    %p68 = scmp.eq.s32.totalorder %s9, 1
    %p69 = scmp.ne.s32.totalorder %s64, %s66
    %p70 = scmp.eq.s32.totalorder %s9, 0
    %p71 = por %p69, %p70
    %p72 = scmp.ne.s32.totalorder %s64, %s66
    %p73 = scmp.eq.s32.totalorder %s14, 1
    %p74 = por %p72, %p73
    %p75 = scmp.ne.s32.totalorder %s66, %s67
    %p76 = scmp.eq.s32.totalorder %s14, 0
    %p77 = por %p75, %p76
    %p78 = scmp.ne.s32.totalorder %s66, %s67
    %p79 = scmp.eq.s32.totalorder %s15, 1
    %p80 = por %p78, %p79
    %p82 = scmp.ne.s32.totalorder %s67, %s81
    %p83 = scmp.eq.s32.totalorder %s15, 0
    %p84 = por %p82, %p83
    %s85 = ssub.s32 %s9, %s16
    %p86 = scmp.eq.s32.totalorder %s85, 0
    %s88 = sadd.s32 %s87, 1
    %s89 = scalar_select %p86, %s87, %s88
    %p92 = pneg %p86
    %p93 = scmp.eq.s32.totalorder %s9, 1
    %p94 = por %p92, %p93
    %p95 = scmp.ne.s32.totalorder %s87, %s90
    %p96 = scmp.eq.s32.totalorder %s9, 0
    %p97 = por %p95, %p96
    %p98 = scmp.ne.s32.totalorder %s87, %s90
    %p99 = scmp.eq.s32.totalorder %s14, 1
    %p100 = por %p98, %p99
    %p101 = scmp.ne.s32.totalorder %s90, %s91
    %p102 = scmp.eq.s32.totalorder %s14, 0
    %p103 = por %p101, %p102
    %p104 = scmp.ne.s32.totalorder %s90, %s91
    %p105 = scmp.eq.s32.totalorder %s15, 1
    %p106 = por %p104, %p105
    %p108 = scmp.ne.s32.totalorder %s91, %s107
    %p109 = scmp.eq.s32.totalorder %s15, 0
    %p110 = por %p108, %p109
    %p111 = scmp.le.s32.totalorder 1, %s9
    %p112 = scmp.lt.s32.totalorder %s9, 3
    %p113 = pnand %p111, %p112
    %p114 = pneg %p113
    // Predicated region
    $region9: #{convnet_encoder4_forward.1} parent=5 // pred_check
      _
    $region10: #{convnet_encoder4_forward.1} parent=5 // pred_check_branch
      %116 = sbr.rel (%p113) target = $region12
    $region11: #{convnet_encoder4_forward.1} parent=5 // pred_region
      %s117 = ssub.s32 %s9, 1
      // Predicated region
      $region13: #{convnet_encoder4_forward.1} parent=11 // pred_check
        %p118 = pneg %p56
      $region14: #{convnet_encoder4_forward.1} parent=11 // pred_check_branch
        %120 = sbr.rel (%p118) target = $region16
      $region15: #{convnet_encoder4_forward.1} parent=11 // pred_region
        _
      $region16: #{convnet_encoder4_forward.1} parent=11 // pred_fallthru
        _
      // Predicated region
      $region17: #{convnet_encoder4_forward.1} parent=11 // pred_check
        %p121 = pneg %p77
      $region18: #{convnet_encoder4_forward.1} parent=11 // pred_check_branch
        %123 = sbr.rel (%p121) target = $region20
      $region19: #{convnet_encoder4_forward.1} parent=11 // pred_region
        _
      $region20: #{convnet_encoder4_forward.1} parent=11 // pred_fallthru
        _
    $region12: #{convnet_encoder4_forward.1} parent=5 // pred_fallthru
      _
    %p124 = scmp.lt.s32.totalorder %s9, 2
    // Predicated region
    $region21: #{convnet_encoder4_forward.1} parent=5 // pred_check
      %p125 = pneg %p124
    $region22: #{convnet_encoder4_forward.1} parent=5 // pred_check_branch
      %127 = sbr.rel (%p125) target = $region24
    $region23: #{convnet_encoder4_forward.1} parent=5 // pred_region
      // Predicated region
      $region25: #{convnet_encoder4_forward.1} parent=23 // pred_check
        %p128 = pneg %p29
      $region26: #{convnet_encoder4_forward.1} parent=23 // pred_check_branch
        %130 = sbr.rel (%p128) target = $region28
      $region27: #{convnet_encoder4_forward.1} parent=23 // pred_region
        %p131 = scmp.lt.s32.totalorder %s9, 1
        %s132 = scalar_select %p131, %s9, 1
        %s133 = smul.addr %s132, 3
        %s134 = smul.addr %s133, 8
        %s135 = scalar_lea.vmem %s0, %s134
      $region28: #{convnet_encoder4_forward.1} parent=23 // pred_fallthru
        _
    $region24: #{convnet_encoder4_forward.1} parent=5 // pred_fallthru
      _
    %p136 = scmp.le.s32.totalorder 1, %s9
    %p137 = scmp.lt.s32.totalorder %s9, 3
    %p138 = pnand %p136, %p137
    %p139 = pneg %p138
    // Predicated region
    $region29: #{convnet_encoder4_forward.1} parent=5 // pred_check
      _
    $region30: #{convnet_encoder4_forward.1} parent=5 // pred_check_branch
      %141 = sbr.rel (%p138) target = $region32
    $region31: #{convnet_encoder4_forward.1} parent=5 // pred_region
      %s142 = ssub.s32 %s9, 1
      %p143 = scmp.lt.s32.totalorder %s14, 1
      %s144 = scalar_select %p143, %s14, 1
      %s145 = smul.addr %s144, 3
      %s146 = smul.addr %s145, 8
      %s147 = scalar_lea.vmem %s0, %s146
      %p148 = pneg %p35
      %p149 = pneg %p32
      %p150 = pneg %p56
      %p151 = pneg %p53
      %p152 = pneg %p77
      %p153 = pneg %p74
      %p154 = pneg %p103
      %p155 = pneg %p100
      %p156 = scmp.lt.s32.totalorder %s14, 1
      %s157 = scalar_select %p156, %s14, 1
      %s158 = smul.addr %s157, 4
      %s159 = scalar_lea.vmem %s3, %s158
      %p160 = scmp.lt.s32.totalorder %s14, 1
      %s161 = scalar_select %p160, %s14, 1
      %s162 = smul.addr %s161, 3
      %s163 = smul.addr %s162, 8
      %s164 = scalar_lea.vmem %s0, %s163
      %p165 = scmp.lt.s32.totalorder %s14, 1
      %s166 = scalar_select %p165, %s14, 1
      %s167 = smul.addr %s166, 4
      %s168 = scalar_lea.vmem %s3, %s167
      %v170 = vld [vmem:[%s164] sm:$0xff]
      %v171 = vld [vmem:[%s164 + $0x8] sm:$0xff]
      %v172 = vld [vmem:[%s164 + $0x10] sm:$0x3]
      %173 = vst [vmem:[#allocation2] sm:$0xff] %v170
      %174 = vst [vmem:[#allocation2 + $0x8] sm:$0xff] %v171
      %175 = vst [vmem:[#allocation2 + $0x10] sm:$0x3] %v172
      %v176 = vld [vmem:[%s2] sm:$0xf]
      %v177 = vld [vmem:[#allocation2] sm:$0xff]
      %v178 = vld [vmem:[#allocation2 + $0x8] sm:$0x1f]
      %v179 = vld [vmem:[#allocation2 + $0x1] sm:$0xff]
      %v180 = vld [vmem:[#allocation2 + $0x9] sm:$0x1f]
      %v181 = vld [vmem:[#allocation2 + $0x2] sm:$0xff]
      %v182 = vld [vmem:[#allocation2 + $0xa] sm:$0x1f]
      %v183 = vld [vmem:[#allocation2 + $0x3] sm:$0xff]
      %v184 = vld [vmem:[#allocation2 + $0xb] sm:$0x1f]
      %v185 = vld [vmem:[#allocation2 + $0x4] sm:$0xff]
      %v186 = vld [vmem:[#allocation2 + $0xc] sm:$0x1f]
      %v187 = vld [vmem:[#allocation2 + $0x5] sm:$0xff]
      %v188 = vld [vmem:[#allocation2 + $0xd] sm:$0x1f]
      %v189 = vpack.c.bf16 %v178, %v177
      %v190 = vpack.c.bf16 %v180, %v179
      %v191 = vpack.c.bf16 %v182, %v181
      %v192 = vpack.c.bf16 %v184, %v183
      %v193 = vpack.c.bf16 %v186, %v185
      %v194 = vpack.c.bf16 %v188, %v187
      %v195 = vld [vmem:[%s1] sm:$0xf]
      %v196 = vld [vmem:[%s1 + $0x4] sm:$0xf]
      %v197 = vld [vmem:[%s1 + $0x8] sm:$0xf]
      %v198 = vld [vmem:[%s1 + $0xc] sm:$0xf]
      %v199 = vld [vmem:[%s1 + $0x10] sm:$0xf]
      %v200 = vld [vmem:[%s1 + $0x14] sm:$0xf]
      %v201 = vld [vmem:[%s1 + $0x18] sm:$0xf]
      %v202 = vld [vmem:[%s1 + $0x1c] sm:$0xf]
      %v203 = vld [vmem:[%s1 + $0x20] sm:$0xf]
      %v204 = vld [vmem:[%s1 + $0x24] sm:$0xf]
      %v205 = vld [vmem:[%s1 + $0x28] sm:$0xf]
      %v206 = vld [vmem:[%s1 + $0x2c] sm:$0xf]
      %v207 = vld [vmem:[%s1 + $0x30] sm:$0xf]
      %v208 = vld [vmem:[%s1 + $0x34] sm:$0xf]
      %v209 = vld [vmem:[%s1 + $0x38] sm:$0xf]
      %v210 = vld [vmem:[%s1 + $0x3c] sm:$0xf]
      %v211 = vld [vmem:[%s1 + $0x40] sm:$0xf]
      %v212 = vld [vmem:[%s1 + $0x44] sm:$0xf]
      %v213 = vld [vmem:[%s1 + $0x48] sm:$0xf]
      %v214 = vld [vmem:[%s1 + $0x4c] sm:$0xf]
      %v215 = vld [vmem:[%s1 + $0x50] sm:$0xf]
      %v216 = vld [vmem:[%s1 + $0x54] sm:$0xf]
      %v217 = vld [vmem:[%s1 + $0x58] sm:$0xf]
      %v218 = vld [vmem:[%s1 + $0x5c] sm:$0xf]
      %v219 = vld [vmem:[%s1 + $0x60] sm:$0xf]
      %v220 = vld [vmem:[%s1 + $0x64] sm:$0xf]
      %v221 = vld [vmem:[%s1 + $0x68] sm:$0xf]
      %v222 = vld [vmem:[%s1 + $0x6c] sm:$0xf]
      %v223 = vld [vmem:[%s1 + $0x70] sm:$0xf]
      %v224 = vld [vmem:[%s1 + $0x74] sm:$0xf]
      %v225 = vld [vmem:[%s1 + $0x78] sm:$0xf]
      %v226 = vld [vmem:[%s1 + $0x7c] sm:$0xf]
      %v227 = vld [vmem:[%s1 + $0x80] sm:$0xf]
      %v228 = vld [vmem:[%s1 + $0x84] sm:$0xf]
      %v229 = vld [vmem:[%s1 + $0x88] sm:$0xf]
      %v230 = vld [vmem:[%s1 + $0x8c] sm:$0xf]
      %v231 = vld [vmem:[%s1 + $0x90] sm:$0xf]
      %v232 = vld [vmem:[%s1 + $0x94] sm:$0xf]
      %v233 = vld [vmem:[%s1 + $0x98] sm:$0xf]
      %v234 = vld [vmem:[%s1 + $0x9c] sm:$0xf]
      %v235 = vld [vmem:[%s1 + $0xa0] sm:$0xf]
      %v236 = vld [vmem:[%s1 + $0xa4] sm:$0xf]
      %v237 = vld [vmem:[%s1 + $0xa8] sm:$0xf]
      %v238 = vld [vmem:[%s1 + $0xac] sm:$0xf]
      %v239 = vld [vmem:[%s1 + $0xb0] sm:$0xf]
      %v240 = vld [vmem:[%s1 + $0xb4] sm:$0xf]
      %v241 = vld [vmem:[%s1 + $0xb8] sm:$0xf]
      %v242 = vld [vmem:[%s1 + $0xbc] sm:$0xf]
      %v243 = vld [vmem:[%s1 + $0xc0] sm:$0xf]
      %v244 = vld [vmem:[%s1 + $0xc4] sm:$0xf]
      %v245 = vld [vmem:[%s1 + $0xc8] sm:$0xf]
      %v246 = vld [vmem:[%s1 + $0xcc] sm:$0xf]
      %v247 = vld [vmem:[%s1 + $0xd0] sm:$0xf]
      %v248 = vld [vmem:[%s1 + $0xd4] sm:$0xf]
      %v249 = vld [vmem:[%s1 + $0xd8] sm:$0xf]
      %v250 = vld [vmem:[%s1 + $0xdc] sm:$0xf]
      %v251 = vld [vmem:[%s1 + $0xe0] sm:$0xf]
      %v252 = vld [vmem:[%s1 + $0xe4] sm:$0xf]
      %v253 = vld [vmem:[%s1 + $0xe8] sm:$0xf]
      %v254 = vld [vmem:[%s1 + $0xec] sm:$0xf]
      %v255 = vld [vmem:[%s1 + $0xf0] sm:$0xf]
      %v256 = vld [vmem:[%s1 + $0xf4] sm:$0xf]
      %v257 = vld [vmem:[%s1 + $0xf8] sm:$0xf]
      %v258 = vld [vmem:[%s1 + $0xfc] sm:$0xf]
      %v259 = vld [vmem:[%s1 + $0x100] sm:$0xf]
      %v260 = vld [vmem:[%s1 + $0x104] sm:$0xf]
      %v261 = vld [vmem:[%s1 + $0x108] sm:$0xf]
      %v262 = vld [vmem:[%s1 + $0x10c] sm:$0xf]
      %v263 = vld [vmem:[%s1 + $0x110] sm:$0xf]
      %v264 = vld [vmem:[%s1 + $0x114] sm:$0xf]
      %v265 = vld [vmem:[%s1 + $0x118] sm:$0xf]
      %v266 = vld [vmem:[%s1 + $0x11c] sm:$0xf]
      %v267 = vld [vmem:[%s1 + $0x120] sm:$0xf]
      %v268 = vld [vmem:[%s1 + $0x124] sm:$0xf]
      %v269 = vld [vmem:[%s1 + $0x128] sm:$0xf]
      %v270 = vld [vmem:[%s1 + $0x12c] sm:$0xf]
      %v271 = vld [vmem:[%s1 + $0x130] sm:$0xf]
      %v272 = vld [vmem:[%s1 + $0x134] sm:$0xf]
      %v273 = vld [vmem:[%s1 + $0x138] sm:$0xf]
      %v274 = vld [vmem:[%s1 + $0x13c] sm:$0xf]
      %v275 = vld [vmem:[%s1 + $0x140] sm:$0xf]
      %v276 = vld [vmem:[%s1 + $0x144] sm:$0xf]
      %v277 = vld [vmem:[%s1 + $0x148] sm:$0xf]
      %v278 = vld [vmem:[%s1 + $0x14c] sm:$0xf]
      %v279 = vld [vmem:[%s1 + $0x150] sm:$0xf]
      %v280 = vld [vmem:[%s1 + $0x154] sm:$0xf]
      %v281 = vld [vmem:[%s1 + $0x158] sm:$0xf]
      %v282 = vld [vmem:[%s1 + $0x15c] sm:$0xf]
      %v283 = vld [vmem:[%s1 + $0x160] sm:$0xf]
      %v284 = vld [vmem:[%s1 + $0x164] sm:$0xf]
      %v285 = vld [vmem:[%s1 + $0x168] sm:$0xf]
      %v286 = vld [vmem:[%s1 + $0x16c] sm:$0xf]
      %v287 = vld [vmem:[%s1 + $0x170] sm:$0xf]
      %v288 = vld [vmem:[%s1 + $0x174] sm:$0xf]
      %v289 = vld [vmem:[%s1 + $0x178] sm:$0xf]
      %v290 = vld [vmem:[%s1 + $0x17c] sm:$0xf]
      %v291 = vlaneseq
      %v292 = vshrl.u32 %v291, 7
      %v293 = vsub.s32 0, %v292
      %v294 = vrot.slane %v176, %v293
      %v391 = vunpack.c.l.b16 %v195
      %v392 = vunpack.c.l.b16 %v196
      %v393 = vunpack.c.l.b16 %v197
      %v394 = vunpack.c.l.b16 %v198
      %v395 = vunpack.c.l.b16 %v199
      %v396 = vunpack.c.l.b16 %v200
      %v397 = vunpack.c.l.b16 %v201
      %v398 = vunpack.c.l.b16 %v202
      %v399 = vunpack.c.l.b16 %v203
      %v400 = vunpack.c.l.b16 %v204
      %v401 = vunpack.c.l.b16 %v205
      %v402 = vunpack.c.l.b16 %v206
      %v403 = vunpack.c.l.b16 %v207
      %v404 = vunpack.c.l.b16 %v208
      %v405 = vunpack.c.l.b16 %v209
      %v406 = vunpack.c.l.b16 %v210
      %v407 = vunpack.c.l.b16 %v211
      %v408 = vunpack.c.l.b16 %v212
      %v409 = vunpack.c.l.b16 %v213
      %v410 = vunpack.c.l.b16 %v214
      %v411 = vunpack.c.l.b16 %v215
      %v412 = vunpack.c.l.b16 %v216
      %v413 = vunpack.c.l.b16 %v217
      %v414 = vunpack.c.l.b16 %v218
      %v415 = vunpack.c.l.b16 %v219
      %v416 = vunpack.c.l.b16 %v220
      %v417 = vunpack.c.l.b16 %v221
      %v418 = vunpack.c.l.b16 %v222
      %v419 = vunpack.c.l.b16 %v223
      %v420 = vunpack.c.l.b16 %v224
      %v421 = vunpack.c.l.b16 %v225
      %v422 = vunpack.c.l.b16 %v226
      %v423 = vunpack.c.l.b16 %v227
      %v424 = vunpack.c.l.b16 %v228
      %v425 = vunpack.c.l.b16 %v229
      %v426 = vunpack.c.l.b16 %v230
      %v427 = vunpack.c.l.b16 %v231
      %v428 = vunpack.c.l.b16 %v232
      %v429 = vunpack.c.l.b16 %v233
      %v430 = vunpack.c.l.b16 %v234
      %v431 = vunpack.c.l.b16 %v235
      %v432 = vunpack.c.l.b16 %v236
      %v433 = vunpack.c.l.b16 %v237
      %v434 = vunpack.c.l.b16 %v238
      %v435 = vunpack.c.l.b16 %v239
      %v436 = vunpack.c.l.b16 %v240
      %v437 = vunpack.c.l.b16 %v241
      %v438 = vunpack.c.l.b16 %v242
      %v439 = vunpack.c.l.b16 %v243
      %v440 = vunpack.c.l.b16 %v244
      %v441 = vunpack.c.l.b16 %v245
      %v442 = vunpack.c.l.b16 %v246
      %v443 = vunpack.c.l.b16 %v247
      %v444 = vunpack.c.l.b16 %v248
      %v445 = vunpack.c.l.b16 %v249
      %v446 = vunpack.c.l.b16 %v250
      %v447 = vunpack.c.l.b16 %v251
      %v448 = vunpack.c.l.b16 %v252
      %v449 = vunpack.c.l.b16 %v253
      %v450 = vunpack.c.l.b16 %v254
      %v451 = vunpack.c.l.b16 %v255
      %v452 = vunpack.c.l.b16 %v256
      %v453 = vunpack.c.l.b16 %v257
      %v454 = vunpack.c.l.b16 %v258
      %v455 = vunpack.c.l.b16 %v259
      %v456 = vunpack.c.l.b16 %v260
      %v457 = vunpack.c.l.b16 %v261
      %v458 = vunpack.c.l.b16 %v262
      %v459 = vunpack.c.l.b16 %v263
      %v460 = vunpack.c.l.b16 %v264
      %v461 = vunpack.c.l.b16 %v265
      %v462 = vunpack.c.l.b16 %v266
      %v463 = vunpack.c.l.b16 %v267
      %v464 = vunpack.c.l.b16 %v268
      %v465 = vunpack.c.l.b16 %v269
      %v466 = vunpack.c.l.b16 %v270
      %v467 = vunpack.c.l.b16 %v271
      %v468 = vunpack.c.l.b16 %v272
      %v469 = vunpack.c.l.b16 %v273
      %v470 = vunpack.c.l.b16 %v274
      %v471 = vunpack.c.l.b16 %v275
      %v472 = vunpack.c.l.b16 %v276
      %v473 = vunpack.c.l.b16 %v277
      %v474 = vunpack.c.l.b16 %v278
      %v475 = vunpack.c.l.b16 %v279
      %v476 = vunpack.c.l.b16 %v280
      %v477 = vunpack.c.l.b16 %v281
      %v478 = vunpack.c.l.b16 %v282
      %v479 = vunpack.c.l.b16 %v283
      %v480 = vunpack.c.l.b16 %v284
      %v481 = vunpack.c.l.b16 %v285
      %v482 = vunpack.c.l.b16 %v286
      %v483 = vunpack.c.l.b16 %v287
      %v484 = vunpack.c.l.b16 %v288
      %v485 = vunpack.c.l.b16 %v289
      %v486 = vunpack.c.l.b16 %v290
      %v487 = vpack.c.b16 %v392, %v391
      %v488 = vpack.c.b16 %v394, %v393
      %v489 = vpack.c.b16 %v396, %v395
      %v490 = vpack.c.b16 %v398, %v397
      %v491 = vpack.c.b16 %v400, %v399
      %v492 = vpack.c.b16 %v402, %v401
      %v493 = vpack.c.b16 %v404, %v403
      %v494 = vpack.c.b16 %v406, %v405
      %v495 = vpack.c.b16 %v408, %v407
      %v496 = vpack.c.b16 %v410, %v409
      %v497 = vpack.c.b16 %v412, %v411
      %v498 = vpack.c.b16 %v414, %v413
      %v499 = vpack.c.b16 %v416, %v415
      %v500 = vpack.c.b16 %v418, %v417
      %v501 = vpack.c.b16 %v420, %v419
      %v502 = vpack.c.b16 %v422, %v421
      %v503 = vpack.c.b16 %v424, %v423
      %v504 = vpack.c.b16 %v426, %v425
      %v505 = vpack.c.b16 %v428, %v427
      %v506 = vpack.c.b16 %v430, %v429
      %v507 = vpack.c.b16 %v432, %v431
      %v508 = vpack.c.b16 %v434, %v433
      %v509 = vpack.c.b16 %v436, %v435
      %v510 = vpack.c.b16 %v438, %v437
      %v511 = vpack.c.b16 %v440, %v439
      %v512 = vpack.c.b16 %v442, %v441
      %v513 = vpack.c.b16 %v444, %v443
      %v514 = vpack.c.b16 %v446, %v445
      %v515 = vpack.c.b16 %v448, %v447
      %v516 = vpack.c.b16 %v450, %v449
      %v517 = vpack.c.b16 %v452, %v451
      %v518 = vpack.c.b16 %v454, %v453
      %v519 = vpack.c.b16 %v456, %v455
      %v520 = vpack.c.b16 %v458, %v457
      %v521 = vpack.c.b16 %v460, %v459
      %v522 = vpack.c.b16 %v462, %v461
      %v523 = vpack.c.b16 %v464, %v463
      %v524 = vpack.c.b16 %v466, %v465
      %v525 = vpack.c.b16 %v468, %v467
      %v526 = vpack.c.b16 %v470, %v469
      %v527 = vpack.c.b16 %v472, %v471
      %v528 = vpack.c.b16 %v474, %v473
      %v529 = vpack.c.b16 %v476, %v475
      %v530 = vpack.c.b16 %v478, %v477
      %v531 = vpack.c.b16 %v480, %v479
      %v532 = vpack.c.b16 %v482, %v481
      %v533 = vpack.c.b16 %v484, %v483
      %v534 = vpack.c.b16 %v486, %v485
      %583 = vmatprep.subr.bf16.mxu0 0
      %584 = vmatpush1.bf16.msra.mxu0 %v487
      %585 = vmatprep.subr.bf16.mxu0 0
      %586 = vmatpush1.bf16.msra.mxu0 %v488
      %587 = vmatprep.subr.bf16.mxu0 0
      %588 = vmatpush1.bf16.msra.mxu0 %v489
      %589 = vmatprep.subr.bf16.mxu0 0
      %590 = vmatpush1.bf16.msra.mxu0 %v490
      %591 = vmatprep.subr.bf16.mxu0 0
      %592 = vmatpush1.bf16.msra.mxu0 %v491
      %593 = vmatprep.subr.bf16.mxu0 0
      %594 = vmatpush1.bf16.msra.mxu0 %v492
      %595 = vmatprep.subr.bf16.mxu0 0
      %596 = vmatpush1.bf16.msra.mxu0 %v493
      %597 = vmatprep.subr.bf16.mxu0 0
      %598 = vmatpush1.bf16.msra.mxu0 %v494
      %599 = vmatprep.subr.bf16.mxu0 0
      %600 = vmatpush1.bf16.msra.mxu0 %v495
      %601 = vmatprep.subr.bf16.mxu0 0
      %602 = vmatpush1.bf16.msra.mxu0 %v496
      %603 = vmatprep.subr.bf16.mxu0 0
      %604 = vmatpush1.bf16.msra.mxu0 %v497
      %605 = vmatprep.subr.bf16.mxu0 0
      %606 = vmatpush1.bf16.msra.mxu0 %v498
      %607 = vmatprep.subr.bf16.mxu0 0
      %608 = vmatpush1.bf16.msra.mxu0 %v499
      %609 = vmatprep.subr.bf16.mxu0 0
      %610 = vmatpush1.bf16.msra.mxu0 %v500
      %611 = vmatprep.subr.bf16.mxu0 0
      %612 = vmatpush1.bf16.msra.mxu0 %v501
      %613 = vmatprep.subr.bf16.mxu0 0
      %614 = vmatpush1.bf16.msra.mxu0 %v502
      %615 = vmatprep.mubr.bf16.mxu0 %v190
      %616 = vmatmul.mubr.bf16.gmra.mrb[0].mxu0 %v189
      %v617 = vpop.f32.mrb[0].mxu0
      %v618 = vadd.f32 %v294, %v617
      %v619 = vpop.f32.mrb[0].mxu0
      %v620 = vpop.f32.mrb[0].mxu0
      %v621 = vadd.f32 %v294, %v620
      %v622 = vpop.f32.mrb[0].mxu0
      %623 = vdwg.mxu0
      %624 = vmatprep.subr.bf16.mxu0 0
      %625 = vmatpush1.bf16.msra.mxu0 %v503
      %626 = vmatprep.subr.bf16.mxu0 0
      %627 = vmatpush1.bf16.msra.mxu0 %v504
      %628 = vmatprep.subr.bf16.mxu0 0
      %629 = vmatpush1.bf16.msra.mxu0 %v505
      %630 = vmatprep.subr.bf16.mxu0 0
      %631 = vmatpush1.bf16.msra.mxu0 %v506
      %632 = vmatprep.subr.bf16.mxu0 0
      %633 = vmatpush1.bf16.msra.mxu0 %v507
      %634 = vmatprep.subr.bf16.mxu0 0
      %635 = vmatpush1.bf16.msra.mxu0 %v508
      %636 = vmatprep.subr.bf16.mxu0 0
      %637 = vmatpush1.bf16.msra.mxu0 %v509
      %638 = vmatprep.subr.bf16.mxu0 0
      %639 = vmatpush1.bf16.msra.mxu0 %v510
      %640 = vmatprep.subr.bf16.mxu0 0
      %641 = vmatpush1.bf16.msra.mxu0 %v511
      %642 = vmatprep.subr.bf16.mxu0 0
      %643 = vmatpush1.bf16.msra.mxu0 %v512
      %644 = vmatprep.subr.bf16.mxu0 0
      %645 = vmatpush1.bf16.msra.mxu0 %v513
      %646 = vmatprep.subr.bf16.mxu0 0
      %647 = vmatpush1.bf16.msra.mxu0 %v514
      %648 = vmatprep.subr.bf16.mxu0 0
      %649 = vmatpush1.bf16.msra.mxu0 %v515
      %650 = vmatprep.subr.bf16.mxu0 0
      %651 = vmatpush1.bf16.msra.mxu0 %v516
      %652 = vmatprep.subr.bf16.mxu0 0
      %653 = vmatpush1.bf16.msra.mxu0 %v517
      %654 = vmatprep.subr.bf16.mxu0 0
      %655 = vmatpush1.bf16.msra.mxu0 %v518
      %656 = vmatprep.mubr.bf16.mxu0 %v192
      %657 = vmatmul.mubr.bf16.gmra.mrb[0].mxu0 %v191
      %v658 = vpop.f32.mrb[0].mxu0
      %v659 = vadd.f32 %v618, %v658
      %v660 = vpop.f32.mrb[0].mxu0
      %v661 = vpop.f32.mrb[0].mxu0
      %v662 = vadd.f32 %v621, %v661
      %v663 = vpop.f32.mrb[0].mxu0
      %664 = vdwg.mxu0
      %665 = vmatprep.subr.bf16.mxu0 0
      %666 = vmatpush1.bf16.msra.mxu0 %v519
      %667 = vmatprep.subr.bf16.mxu0 0
      %668 = vmatpush1.bf16.msra.mxu0 %v520
      %669 = vmatprep.subr.bf16.mxu0 0
      %670 = vmatpush1.bf16.msra.mxu0 %v521
      %671 = vmatprep.subr.bf16.mxu0 0
      %672 = vmatpush1.bf16.msra.mxu0 %v522
      %673 = vmatprep.subr.bf16.mxu0 0
      %674 = vmatpush1.bf16.msra.mxu0 %v523
      %675 = vmatprep.subr.bf16.mxu0 0
      %676 = vmatpush1.bf16.msra.mxu0 %v524
      %677 = vmatprep.subr.bf16.mxu0 0
      %678 = vmatpush1.bf16.msra.mxu0 %v525
      %679 = vmatprep.subr.bf16.mxu0 0
      %680 = vmatpush1.bf16.msra.mxu0 %v526
      %681 = vmatprep.subr.bf16.mxu0 0
      %682 = vmatpush1.bf16.msra.mxu0 %v527
      %683 = vmatprep.subr.bf16.mxu0 0
      %684 = vmatpush1.bf16.msra.mxu0 %v528
      %685 = vmatprep.subr.bf16.mxu0 0
      %686 = vmatpush1.bf16.msra.mxu0 %v529
      %687 = vmatprep.subr.bf16.mxu0 0
      %688 = vmatpush1.bf16.msra.mxu0 %v530
      %689 = vmatprep.subr.bf16.mxu0 0
      %690 = vmatpush1.bf16.msra.mxu0 %v531
      %691 = vmatprep.subr.bf16.mxu0 0
      %692 = vmatpush1.bf16.msra.mxu0 %v532
      %693 = vmatprep.subr.bf16.mxu0 0
      %694 = vmatpush1.bf16.msra.mxu0 %v533
      %695 = vmatprep.subr.bf16.mxu0 0
      %696 = vmatpush1.bf16.msra.mxu0 %v534
      %697 = vmatprep.mubr.bf16.mxu0 %v194
      %698 = vmatmul.mubr.bf16.gmra.mrb[0].mxu0 %v193
      %v699 = vpop.f32.mrb[0].mxu0
      %v700 = vadd.f32 %v659, %v699
      %v701 = vpop.f32.mrb[0].mxu0
      %v702 = vpop.f32.mrb[0].mxu0
      %v703 = vadd.f32 %v662, %v702
      %v704 = vpop.f32.mrb[0].mxu0
      %705 = vdwg.mxu0
      %v706 = vmax.f32 %v700, 0.0
      %v707 = vmax.f32 %v703, 0.0
      %vm708 = vcmask 1044480
      %v709 = vsel %vm708, %v707, -inf
      %v710 = vmax.f32 %v706, %v709
      %v711 = vrot.slane %v710, 4
      %v712 = vmax.f32 %v710, %v711
      %v713 = vrot.slane %v712, 2
      %v714 = vmax.f32 %v712, %v713
      %v715 = vrot.slane %v714, 1
      %v716 = vmax.f32 %v714, %v715
      %717 = vst [vmem:[%s168] sm:$0x1] %v716
      %718 = vst [vmem:[#allocation2] sm:$0xff] 0.0
      %719 = vst [vmem:[#allocation2 + $0x8] sm:$0xff] 0.0
      %720 = vst [vmem:[#allocation2 + $0x10] sm:$0x3] 0.0
      %721 = vst [vmem:[#allocation2 + $0x1] sm:$0xff] %v706
      %722 = vst [vmem:[#allocation2 + $0x9] sm:$0x1f] %v707
      %v723 = vld [vmem:[#allocation2] sm:$0xff]
      %v724 = vld [vmem:[#allocation2 + $0x8] sm:$0x3]
      %v725 = vld [vmem:[#allocation2 + $0x1] sm:$0xff]
      %v726 = vld [vmem:[#allocation2 + $0x9] sm:$0x3]
      %v727 = vld [vmem:[#allocation2 + $0x2] sm:$0xff]
      %v728 = vld [vmem:[#allocation2 + $0xa] sm:$0x3]
      %v729 = vld [vmem:[#allocation2 + $0x3] sm:$0xff]
      %v730 = vld [vmem:[#allocation2 + $0xb] sm:$0x3]
      %v731 = vld [vmem:[#allocation2 + $0x4] sm:$0xff]
      %v732 = vld [vmem:[#allocation2 + $0xc] sm:$0x3]
      %v733 = vld [vmem:[#allocation2 + $0x5] sm:$0xff]
      %v734 = vld [vmem:[#allocation2 + $0xd] sm:$0x3]
      %v735 = vpack.c.bf16 %v724, %v723
      %v736 = vpack.c.bf16 %v726, %v725
      %v737 = vpack.c.bf16 %v728, %v727
      %v738 = vpack.c.bf16 %v730, %v729
      %v739 = vpack.c.bf16 %v732, %v731
      %v740 = vpack.c.bf16 %v734, %v733
      %s741 = scalar_lea.vmem %s1, 384
      %v742 = vld [vmem:[%s741] sm:$0xf]
      %v743 = vld [vmem:[%s741 + $0x4] sm:$0xf]
      %v744 = vld [vmem:[%s741 + $0x8] sm:$0xf]
      %v745 = vld [vmem:[%s741 + $0xc] sm:$0xf]
      %v746 = vld [vmem:[%s741 + $0x10] sm:$0xf]
      %v747 = vld [vmem:[%s741 + $0x14] sm:$0xf]
      %v748 = vld [vmem:[%s741 + $0x18] sm:$0xf]
      %v749 = vld [vmem:[%s741 + $0x1c] sm:$0xf]
      %v750 = vld [vmem:[%s741 + $0x20] sm:$0xf]
      %v751 = vld [vmem:[%s741 + $0x24] sm:$0xf]
      %v752 = vld [vmem:[%s741 + $0x28] sm:$0xf]
      %v753 = vld [vmem:[%s741 + $0x2c] sm:$0xf]
      %v754 = vld [vmem:[%s741 + $0x30] sm:$0xf]
      %v755 = vld [vmem:[%s741 + $0x34] sm:$0xf]
      %v756 = vld [vmem:[%s741 + $0x38] sm:$0xf]
      %v757 = vld [vmem:[%s741 + $0x3c] sm:$0xf]
      %v758 = vld [vmem:[%s741 + $0x40] sm:$0xf]
      %v759 = vld [vmem:[%s741 + $0x44] sm:$0xf]
      %v760 = vld [vmem:[%s741 + $0x48] sm:$0xf]
      %v761 = vld [vmem:[%s741 + $0x4c] sm:$0xf]
      %v762 = vld [vmem:[%s741 + $0x50] sm:$0xf]
      %v763 = vld [vmem:[%s741 + $0x54] sm:$0xf]
      %v764 = vld [vmem:[%s741 + $0x58] sm:$0xf]
      %v765 = vld [vmem:[%s741 + $0x5c] sm:$0xf]
      %v766 = vld [vmem:[%s741 + $0x60] sm:$0xf]
      %v767 = vld [vmem:[%s741 + $0x64] sm:$0xf]
      %v768 = vld [vmem:[%s741 + $0x68] sm:$0xf]
      %v769 = vld [vmem:[%s741 + $0x6c] sm:$0xf]
      %v770 = vld [vmem:[%s741 + $0x70] sm:$0xf]
      %v771 = vld [vmem:[%s741 + $0x74] sm:$0xf]
      %v772 = vld [vmem:[%s741 + $0x78] sm:$0xf]
      %v773 = vld [vmem:[%s741 + $0x7c] sm:$0xf]
      %v774 = vld [vmem:[%s741 + $0x80] sm:$0xf]
      %v775 = vld [vmem:[%s741 + $0x84] sm:$0xf]
      %v776 = vld [vmem:[%s741 + $0x88] sm:$0xf]
      %v777 = vld [vmem:[%s741 + $0x8c] sm:$0xf]
      %v778 = vld [vmem:[%s741 + $0x90] sm:$0xf]
      %v779 = vld [vmem:[%s741 + $0x94] sm:$0xf]
      %v780 = vld [vmem:[%s741 + $0x98] sm:$0xf]
      %v781 = vld [vmem:[%s741 + $0x9c] sm:$0xf]
      %v782 = vld [vmem:[%s741 + $0xa0] sm:$0xf]
      %v783 = vld [vmem:[%s741 + $0xa4] sm:$0xf]
      %v784 = vld [vmem:[%s741 + $0xa8] sm:$0xf]
      %v785 = vld [vmem:[%s741 + $0xac] sm:$0xf]
      %v786 = vld [vmem:[%s741 + $0xb0] sm:$0xf]
      %v787 = vld [vmem:[%s741 + $0xb4] sm:$0xf]
      %v788 = vld [vmem:[%s741 + $0xb8] sm:$0xf]
      %v789 = vld [vmem:[%s741 + $0xbc] sm:$0xf]
      %v790 = vld [vmem:[%s741 + $0xc0] sm:$0xf]
      %v791 = vld [vmem:[%s741 + $0xc4] sm:$0xf]
      %v792 = vld [vmem:[%s741 + $0xc8] sm:$0xf]
      %v793 = vld [vmem:[%s741 + $0xcc] sm:$0xf]
      %v794 = vld [vmem:[%s741 + $0xd0] sm:$0xf]
      %v795 = vld [vmem:[%s741 + $0xd4] sm:$0xf]
      %v796 = vld [vmem:[%s741 + $0xd8] sm:$0xf]
      %v797 = vld [vmem:[%s741 + $0xdc] sm:$0xf]
      %v798 = vld [vmem:[%s741 + $0xe0] sm:$0xf]
      %v799 = vld [vmem:[%s741 + $0xe4] sm:$0xf]
      %v800 = vld [vmem:[%s741 + $0xe8] sm:$0xf]
      %v801 = vld [vmem:[%s741 + $0xec] sm:$0xf]
      %v802 = vld [vmem:[%s741 + $0xf0] sm:$0xf]
      %v803 = vld [vmem:[%s741 + $0xf4] sm:$0xf]
      %v804 = vld [vmem:[%s741 + $0xf8] sm:$0xf]
      %v805 = vld [vmem:[%s741 + $0xfc] sm:$0xf]
      %v806 = vld [vmem:[%s741 + $0x100] sm:$0xf]
      %v807 = vld [vmem:[%s741 + $0x104] sm:$0xf]
      %v808 = vld [vmem:[%s741 + $0x108] sm:$0xf]
      %v809 = vld [vmem:[%s741 + $0x10c] sm:$0xf]
      %v810 = vld [vmem:[%s741 + $0x110] sm:$0xf]
      %v811 = vld [vmem:[%s741 + $0x114] sm:$0xf]
      %v812 = vld [vmem:[%s741 + $0x118] sm:$0xf]
      %v813 = vld [vmem:[%s741 + $0x11c] sm:$0xf]
      %v814 = vld [vmem:[%s741 + $0x120] sm:$0xf]
      %v815 = vld [vmem:[%s741 + $0x124] sm:$0xf]
      %v816 = vld [vmem:[%s741 + $0x128] sm:$0xf]
      %v817 = vld [vmem:[%s741 + $0x12c] sm:$0xf]
      %v818 = vld [vmem:[%s741 + $0x130] sm:$0xf]
      %v819 = vld [vmem:[%s741 + $0x134] sm:$0xf]
      %v820 = vld [vmem:[%s741 + $0x138] sm:$0xf]
      %v821 = vld [vmem:[%s741 + $0x13c] sm:$0xf]
      %v822 = vld [vmem:[%s741 + $0x140] sm:$0xf]
      %v823 = vld [vmem:[%s741 + $0x144] sm:$0xf]
      %v824 = vld [vmem:[%s741 + $0x148] sm:$0xf]
      %v825 = vld [vmem:[%s741 + $0x14c] sm:$0xf]
      %v826 = vld [vmem:[%s741 + $0x150] sm:$0xf]
      %v827 = vld [vmem:[%s741 + $0x154] sm:$0xf]
      %v828 = vld [vmem:[%s741 + $0x158] sm:$0xf]
      %v829 = vld [vmem:[%s741 + $0x15c] sm:$0xf]
      %v830 = vld [vmem:[%s741 + $0x160] sm:$0xf]
      %v831 = vld [vmem:[%s741 + $0x164] sm:$0xf]
      %v832 = vld [vmem:[%s741 + $0x168] sm:$0xf]
      %v833 = vld [vmem:[%s741 + $0x16c] sm:$0xf]
      %v834 = vld [vmem:[%s741 + $0x170] sm:$0xf]
      %v835 = vld [vmem:[%s741 + $0x174] sm:$0xf]
      %v836 = vld [vmem:[%s741 + $0x178] sm:$0xf]
      %v837 = vld [vmem:[%s741 + $0x17c] sm:$0xf]
      %v838 = vlaneseq
      %v839 = vshrl.u32 %v838, 7
      %v840 = vsub.s32 1, %v839
      %v841 = vrot.slane %v176, %v840
      %v938 = vunpack.c.l.b16 %v742
      %v939 = vunpack.c.l.b16 %v743
      %v940 = vunpack.c.l.b16 %v744
      %v941 = vunpack.c.l.b16 %v745
      %v942 = vunpack.c.l.b16 %v746
      %v943 = vunpack.c.l.b16 %v747
      %v944 = vunpack.c.l.b16 %v748
      %v945 = vunpack.c.l.b16 %v749
      %v946 = vunpack.c.l.b16 %v750
      %v947 = vunpack.c.l.b16 %v751
      %v948 = vunpack.c.l.b16 %v752
      %v949 = vunpack.c.l.b16 %v753
      %v950 = vunpack.c.l.b16 %v754
      %v951 = vunpack.c.l.b16 %v755
      %v952 = vunpack.c.l.b16 %v756
      %v953 = vunpack.c.l.b16 %v757
      %v954 = vunpack.c.l.b16 %v758
      %v955 = vunpack.c.l.b16 %v759
      %v956 = vunpack.c.l.b16 %v760
      %v957 = vunpack.c.l.b16 %v761
      %v958 = vunpack.c.l.b16 %v762
      %v959 = vunpack.c.l.b16 %v763
      %v960 = vunpack.c.l.b16 %v764
      %v961 = vunpack.c.l.b16 %v765
      %v962 = vunpack.c.l.b16 %v766
      %v963 = vunpack.c.l.b16 %v767
      %v964 = vunpack.c.l.b16 %v768
      %v965 = vunpack.c.l.b16 %v769
      %v966 = vunpack.c.l.b16 %v770
      %v967 = vunpack.c.l.b16 %v771
      %v968 = vunpack.c.l.b16 %v772
      %v969 = vunpack.c.l.b16 %v773
      %v970 = vunpack.c.l.b16 %v774
      %v971 = vunpack.c.l.b16 %v775
      %v972 = vunpack.c.l.b16 %v776
      %v973 = vunpack.c.l.b16 %v777
      %v974 = vunpack.c.l.b16 %v778
      %v975 = vunpack.c.l.b16 %v779
      %v976 = vunpack.c.l.b16 %v780
      %v977 = vunpack.c.l.b16 %v781
      %v978 = vunpack.c.l.b16 %v782
      %v979 = vunpack.c.l.b16 %v783
      %v980 = vunpack.c.l.b16 %v784
      %v981 = vunpack.c.l.b16 %v785
      %v982 = vunpack.c.l.b16 %v786
      %v983 = vunpack.c.l.b16 %v787
      %v984 = vunpack.c.l.b16 %v788
      %v985 = vunpack.c.l.b16 %v789
      %v986 = vunpack.c.l.b16 %v790
      %v987 = vunpack.c.l.b16 %v791
      %v988 = vunpack.c.l.b16 %v792
      %v989 = vunpack.c.l.b16 %v793
      %v990 = vunpack.c.l.b16 %v794
      %v991 = vunpack.c.l.b16 %v795
      %v992 = vunpack.c.l.b16 %v796
      %v993 = vunpack.c.l.b16 %v797
      %v994 = vunpack.c.l.b16 %v798
      %v995 = vunpack.c.l.b16 %v799
      %v996 = vunpack.c.l.b16 %v800
      %v997 = vunpack.c.l.b16 %v801
      %v998 = vunpack.c.l.b16 %v802
      %v999 = vunpack.c.l.b16 %v803
      %v1000 = vunpack.c.l.b16 %v804
      %v1001 = vunpack.c.l.b16 %v805
      %v1002 = vunpack.c.l.b16 %v806
      %v1003 = vunpack.c.l.b16 %v807
      %v1004 = vunpack.c.l.b16 %v808
      %v1005 = vunpack.c.l.b16 %v809
      %v1006 = vunpack.c.l.b16 %v810
      %v1007 = vunpack.c.l.b16 %v811
      %v1008 = vunpack.c.l.b16 %v812
      %v1009 = vunpack.c.l.b16 %v813
      %v1010 = vunpack.c.l.b16 %v814
      %v1011 = vunpack.c.l.b16 %v815
      %v1012 = vunpack.c.l.b16 %v816
      %v1013 = vunpack.c.l.b16 %v817
      %v1014 = vunpack.c.l.b16 %v818
      %v1015 = vunpack.c.l.b16 %v819
      %v1016 = vunpack.c.l.b16 %v820
      %v1017 = vunpack.c.l.b16 %v821
      %v1018 = vunpack.c.l.b16 %v822
      %v1019 = vunpack.c.l.b16 %v823
      %v1020 = vunpack.c.l.b16 %v824
      %v1021 = vunpack.c.l.b16 %v825
      %v1022 = vunpack.c.l.b16 %v826
      %v1023 = vunpack.c.l.b16 %v827
      %v1024 = vunpack.c.l.b16 %v828
      %v1025 = vunpack.c.l.b16 %v829
      %v1026 = vunpack.c.l.b16 %v830
      %v1027 = vunpack.c.l.b16 %v831
      %v1028 = vunpack.c.l.b16 %v832
      %v1029 = vunpack.c.l.b16 %v833
      %v1030 = vunpack.c.l.b16 %v834
      %v1031 = vunpack.c.l.b16 %v835
      %v1032 = vunpack.c.l.b16 %v836
      %v1033 = vunpack.c.l.b16 %v837
      %v1034 = vpack.c.b16 %v939, %v938
      %v1035 = vpack.c.b16 %v941, %v940
      %v1036 = vpack.c.b16 %v943, %v942
      %v1037 = vpack.c.b16 %v945, %v944
      %v1038 = vpack.c.b16 %v947, %v946
      %v1039 = vpack.c.b16 %v949, %v948
      %v1040 = vpack.c.b16 %v951, %v950
      %v1041 = vpack.c.b16 %v953, %v952
      %v1042 = vpack.c.b16 %v955, %v954
      %v1043 = vpack.c.b16 %v957, %v956
      %v1044 = vpack.c.b16 %v959, %v958
      %v1045 = vpack.c.b16 %v961, %v960
      %v1046 = vpack.c.b16 %v963, %v962
      %v1047 = vpack.c.b16 %v965, %v964
      %v1048 = vpack.c.b16 %v967, %v966
      %v1049 = vpack.c.b16 %v969, %v968
      %v1050 = vpack.c.b16 %v971, %v970
      %v1051 = vpack.c.b16 %v973, %v972
      %v1052 = vpack.c.b16 %v975, %v974
      %v1053 = vpack.c.b16 %v977, %v976
      %v1054 = vpack.c.b16 %v979, %v978
      %v1055 = vpack.c.b16 %v981, %v980
      %v1056 = vpack.c.b16 %v983, %v982
      %v1057 = vpack.c.b16 %v985, %v984
      %v1058 = vpack.c.b16 %v987, %v986
      %v1059 = vpack.c.b16 %v989, %v988
      %v1060 = vpack.c.b16 %v991, %v990
      %v1061 = vpack.c.b16 %v993, %v992
      %v1062 = vpack.c.b16 %v995, %v994
      %v1063 = vpack.c.b16 %v997, %v996
      %v1064 = vpack.c.b16 %v999, %v998
      %v1065 = vpack.c.b16 %v1001, %v1000
      %v1066 = vpack.c.b16 %v1003, %v1002
      %v1067 = vpack.c.b16 %v1005, %v1004
      %v1068 = vpack.c.b16 %v1007, %v1006
      %v1069 = vpack.c.b16 %v1009, %v1008
      %v1070 = vpack.c.b16 %v1011, %v1010
      %v1071 = vpack.c.b16 %v1013, %v1012
      %v1072 = vpack.c.b16 %v1015, %v1014
      %v1073 = vpack.c.b16 %v1017, %v1016
      %v1074 = vpack.c.b16 %v1019, %v1018
      %v1075 = vpack.c.b16 %v1021, %v1020
      %v1076 = vpack.c.b16 %v1023, %v1022
      %v1077 = vpack.c.b16 %v1025, %v1024
      %v1078 = vpack.c.b16 %v1027, %v1026
      %v1079 = vpack.c.b16 %v1029, %v1028
      %v1080 = vpack.c.b16 %v1031, %v1030
      %v1081 = vpack.c.b16 %v1033, %v1032
      %1130 = vmatprep.subr.bf16.mxu0 0
      %1131 = vmatpush1.bf16.msra.mxu0 %v1034
      %1132 = vmatprep.subr.bf16.mxu0 0
      %1133 = vmatpush1.bf16.msra.mxu0 %v1035
      %1134 = vmatprep.subr.bf16.mxu0 0
      %1135 = vmatpush1.bf16.msra.mxu0 %v1036
      %1136 = vmatprep.subr.bf16.mxu0 0
      %1137 = vmatpush1.bf16.msra.mxu0 %v1037
      %1138 = vmatprep.subr.bf16.mxu0 0
      %1139 = vmatpush1.bf16.msra.mxu0 %v1038
      %1140 = vmatprep.subr.bf16.mxu0 0
      %1141 = vmatpush1.bf16.msra.mxu0 %v1039
      %1142 = vmatprep.subr.bf16.mxu0 0
      %1143 = vmatpush1.bf16.msra.mxu0 %v1040
      %1144 = vmatprep.subr.bf16.mxu0 0
      %1145 = vmatpush1.bf16.msra.mxu0 %v1041
      %1146 = vmatprep.subr.bf16.mxu0 0
      %1147 = vmatpush1.bf16.msra.mxu0 %v1042
      %1148 = vmatprep.subr.bf16.mxu0 0
      %1149 = vmatpush1.bf16.msra.mxu0 %v1043
      %1150 = vmatprep.subr.bf16.mxu0 0
      %1151 = vmatpush1.bf16.msra.mxu0 %v1044
      %1152 = vmatprep.subr.bf16.mxu0 0
      %1153 = vmatpush1.bf16.msra.mxu0 %v1045
      %1154 = vmatprep.subr.bf16.mxu0 0
      %1155 = vmatpush1.bf16.msra.mxu0 %v1046
      %1156 = vmatprep.subr.bf16.mxu0 0
      %1157 = vmatpush1.bf16.msra.mxu0 %v1047
      %1158 = vmatprep.subr.bf16.mxu0 0
      %1159 = vmatpush1.bf16.msra.mxu0 %v1048
      %1160 = vmatprep.subr.bf16.mxu0 0
      %1161 = vmatpush1.bf16.msra.mxu0 %v1049
      %1162 = vmatprep.mubr.bf16.mxu0 %v736
      %1163 = vmatmul.mubr.bf16.gmra.mrb[0].mxu0 %v735
      %v1164 = vpop.f32.mrb[0].mxu0
      %v1165 = vadd.f32 %v841, %v1164
      %v1166 = vpop.f32.mrb[0].mxu0
      %v1167 = vpop.f32.mrb[0].mxu0
      %v1168 = vadd.f32 %v841, %v1167
      %v1169 = vpop.f32.mrb[0].mxu0
      %1170 = vdwg.mxu0
      %1171 = vmatprep.subr.bf16.mxu0 0
      %1172 = vmatpush1.bf16.msra.mxu0 %v1050
      %1173 = vmatprep.subr.bf16.mxu0 0
      %1174 = vmatpush1.bf16.msra.mxu0 %v1051
      %1175 = vmatprep.subr.bf16.mxu0 0
      %1176 = vmatpush1.bf16.msra.mxu0 %v1052
      %1177 = vmatprep.subr.bf16.mxu0 0
      %1178 = vmatpush1.bf16.msra.mxu0 %v1053
      %1179 = vmatprep.subr.bf16.mxu0 0
      %1180 = vmatpush1.bf16.msra.mxu0 %v1054
      %1181 = vmatprep.subr.bf16.mxu0 0
      %1182 = vmatpush1.bf16.msra.mxu0 %v1055
      %1183 = vmatprep.subr.bf16.mxu0 0
      %1184 = vmatpush1.bf16.msra.mxu0 %v1056
      %1185 = vmatprep.subr.bf16.mxu0 0
      %1186 = vmatpush1.bf16.msra.mxu0 %v1057
      %1187 = vmatprep.subr.bf16.mxu0 0
      %1188 = vmatpush1.bf16.msra.mxu0 %v1058
      %1189 = vmatprep.subr.bf16.mxu0 0
      %1190 = vmatpush1.bf16.msra.mxu0 %v1059
      %1191 = vmatprep.subr.bf16.mxu0 0
      %1192 = vmatpush1.bf16.msra.mxu0 %v1060
      %1193 = vmatprep.subr.bf16.mxu0 0
      %1194 = vmatpush1.bf16.msra.mxu0 %v1061
      %1195 = vmatprep.subr.bf16.mxu0 0
      %1196 = vmatpush1.bf16.msra.mxu0 %v1062
      %1197 = vmatprep.subr.bf16.mxu0 0
      %1198 = vmatpush1.bf16.msra.mxu0 %v1063
      %1199 = vmatprep.subr.bf16.mxu0 0
      %1200 = vmatpush1.bf16.msra.mxu0 %v1064
      %1201 = vmatprep.subr.bf16.mxu0 0
      %1202 = vmatpush1.bf16.msra.mxu0 %v1065
      %1203 = vmatprep.mubr.bf16.mxu0 %v738
      %1204 = vmatmul.mubr.bf16.gmra.mrb[0].mxu0 %v737
      %v1205 = vpop.f32.mrb[0].mxu0
      %v1206 = vadd.f32 %v1165, %v1205
      %v1207 = vpop.f32.mrb[0].mxu0
      %v1208 = vpop.f32.mrb[0].mxu0
      %v1209 = vadd.f32 %v1168, %v1208
      %v1210 = vpop.f32.mrb[0].mxu0
      %1211 = vdwg.mxu0
      %1212 = vmatprep.subr.bf16.mxu0 0
      %1213 = vmatpush1.bf16.msra.mxu0 %v1066
      %1214 = vmatprep.subr.bf16.mxu0 0
      %1215 = vmatpush1.bf16.msra.mxu0 %v1067
      %1216 = vmatprep.subr.bf16.mxu0 0
      %1217 = vmatpush1.bf16.msra.mxu0 %v1068
      %1218 = vmatprep.subr.bf16.mxu0 0
      %1219 = vmatpush1.bf16.msra.mxu0 %v1069
      %1220 = vmatprep.subr.bf16.mxu0 0
      %1221 = vmatpush1.bf16.msra.mxu0 %v1070
      %1222 = vmatprep.subr.bf16.mxu0 0
      %1223 = vmatpush1.bf16.msra.mxu0 %v1071
      %1224 = vmatprep.subr.bf16.mxu0 0
      %1225 = vmatpush1.bf16.msra.mxu0 %v1072
      %1226 = vmatprep.subr.bf16.mxu0 0
      %1227 = vmatpush1.bf16.msra.mxu0 %v1073
      %1228 = vmatprep.subr.bf16.mxu0 0
      %1229 = vmatpush1.bf16.msra.mxu0 %v1074
      %1230 = vmatprep.subr.bf16.mxu0 0
      %1231 = vmatpush1.bf16.msra.mxu0 %v1075
      %1232 = vmatprep.subr.bf16.mxu0 0
      %1233 = vmatpush1.bf16.msra.mxu0 %v1076
      %1234 = vmatprep.subr.bf16.mxu0 0
      %1235 = vmatpush1.bf16.msra.mxu0 %v1077
      %1236 = vmatprep.subr.bf16.mxu0 0
      %1237 = vmatpush1.bf16.msra.mxu0 %v1078
      %1238 = vmatprep.subr.bf16.mxu0 0
      %1239 = vmatpush1.bf16.msra.mxu0 %v1079
      %1240 = vmatprep.subr.bf16.mxu0 0
      %1241 = vmatpush1.bf16.msra.mxu0 %v1080
      %1242 = vmatprep.subr.bf16.mxu0 0
      %1243 = vmatpush1.bf16.msra.mxu0 %v1081
      %1244 = vmatprep.mubr.bf16.mxu0 %v740
      %1245 = vmatmul.mubr.bf16.gmra.mrb[0].mxu0 %v739
      %v1246 = vpop.f32.mrb[0].mxu0
      %v1247 = vadd.f32 %v1206, %v1246
      %v1248 = vpop.f32.mrb[0].mxu0
      %v1249 = vpop.f32.mrb[0].mxu0
      %v1250 = vadd.f32 %v1209, %v1249
      %v1251 = vpop.f32.mrb[0].mxu0
      %1252 = vdwg.mxu0
      %v1253 = vmax.f32 %v1247, 0.0
      %v1254 = vmax.f32 %v1250, 0.0
      %vm1255 = vcmask 1041408
      %v1256 = vsel %vm1255, %v1254, -inf
      %v1257 = vmax.f32 %v1253, %v1256
      %v1258 = vrot.slane %v1257, 4
      %v1259 = vmax.f32 %v1257, %v1258
      %v1260 = vrot.slane %v1259, 2
      %v1261 = vmax.f32 %v1259, %v1260
      %v1262 = vrot.slane %v1261, 1
      %v1263 = vmax.f32 %v1261, %v1262
      %1264 = vst [vmem:[%s168 + $0x1] sm:$0x1] %v1263
      %1265 = vst [vmem:[#allocation2] sm:$0xff] 0.0
      %1266 = vst [vmem:[#allocation2 + $0x8] sm:$0xff] 0.0
      %1267 = vst [vmem:[#allocation2 + $0x10] sm:$0x3] 0.0
      %1268 = vst [vmem:[#allocation2 + $0x1] sm:$0xff] %v1253
      %1269 = vst [vmem:[#allocation2 + $0x9] sm:$0x3] %v1254
      %v1270 = vld [vmem:[#allocation2] sm:$0x7f]
      %v1271 = vld [vmem:[#allocation2 + $0x1] sm:$0x7f]
      %v1272 = vld [vmem:[#allocation2 + $0x2] sm:$0x7f]
      %v1273 = vld [vmem:[#allocation2 + $0x3] sm:$0x7f]
      %v1274 = vld [vmem:[#allocation2 + $0x4] sm:$0x7f]
      %v1275 = vld [vmem:[#allocation2 + $0x5] sm:$0x7f]
      %v1276 = vpack.c.bf16 %v1270, %v1270
      %v1277 = vpack.c.bf16 %v1271, %v1271
      %v1278 = vpack.c.bf16 %v1272, %v1272
      %v1279 = vpack.c.bf16 %v1273, %v1273
      %v1280 = vpack.c.bf16 %v1274, %v1274
      %v1281 = vpack.c.bf16 %v1275, %v1275
      %s1282 = scalar_lea.vmem %s1, 768
      %v1283 = vld [vmem:[%s1282] sm:$0xf]
      %v1284 = vld [vmem:[%s1282 + $0x4] sm:$0xf]
      %v1285 = vld [vmem:[%s1282 + $0x8] sm:$0xf]
      %v1286 = vld [vmem:[%s1282 + $0xc] sm:$0xf]
      %v1287 = vld [vmem:[%s1282 + $0x10] sm:$0xf]
      %v1288 = vld [vmem:[%s1282 + $0x14] sm:$0xf]
      %v1289 = vld [vmem:[%s1282 + $0x18] sm:$0xf]
      %v1290 = vld [vmem:[%s1282 + $0x1c] sm:$0xf]
      %v1291 = vld [vmem:[%s1282 + $0x20] sm:$0xf]
      %v1292 = vld [vmem:[%s1282 + $0x24] sm:$0xf]
      %v1293 = vld [vmem:[%s1282 + $0x28] sm:$0xf]
      %v1294 = vld [vmem:[%s1282 + $0x2c] sm:$0xf]
      %v1295 = vld [vmem:[%s1282 + $0x30] sm:$0xf]
      %v1296 = vld [vmem:[%s1282 + $0x34] sm:$0xf]
      %v1297 = vld [vmem:[%s1282 + $0x38] sm:$0xf]
      %v1298 = vld [vmem:[%s1282 + $0x3c] sm:$0xf]
      %v1299 = vld [vmem:[%s1282 + $0x40] sm:$0xf]
      %v1300 = vld [vmem:[%s1282 + $0x44] sm:$0xf]
      %v1301 = vld [vmem:[%s1282 + $0x48] sm:$0xf]
      %v1302 = vld [vmem:[%s1282 + $0x4c] sm:$0xf]
      %v1303 = vld [vmem:[%s1282 + $0x50] sm:$0xf]
      %v1304 = vld [vmem:[%s1282 + $0x54] sm:$0xf]
      %v1305 = vld [vmem:[%s1282 + $0x58] sm:$0xf]
      %v1306 = vld [vmem:[%s1282 + $0x5c] sm:$0xf]
      %v1307 = vld [vmem:[%s1282 + $0x60] sm:$0xf]
      %v1308 = vld [vmem:[%s1282 + $0x64] sm:$0xf]
      %v1309 = vld [vmem:[%s1282 + $0x68] sm:$0xf]
      %v1310 = vld [vmem:[%s1282 + $0x6c] sm:$0xf]
      %v1311 = vld [vmem:[%s1282 + $0x70] sm:$0xf]
      %v1312 = vld [vmem:[%s1282 + $0x74] sm:$0xf]
      %v1313 = vld [vmem:[%s1282 + $0x78] sm:$0xf]
      %v1314 = vld [vmem:[%s1282 + $0x7c] sm:$0xf]
      %v1315 = vld [vmem:[%s1282 + $0x80] sm:$0xf]
      %v1316 = vld [vmem:[%s1282 + $0x84] sm:$0xf]
      %v1317 = vld [vmem:[%s1282 + $0x88] sm:$0xf]
      %v1318 = vld [vmem:[%s1282 + $0x8c] sm:$0xf]
      %v1319 = vld [vmem:[%s1282 + $0x90] sm:$0xf]
      %v1320 = vld [vmem:[%s1282 + $0x94] sm:$0xf]
      %v1321 = vld [vmem:[%s1282 + $0x98] sm:$0xf]
      %v1322 = vld [vmem:[%s1282 + $0x9c] sm:$0xf]
      %v1323 = vld [vmem:[%s1282 + $0xa0] sm:$0xf]
      %v1324 = vld [vmem:[%s1282 + $0xa4] sm:$0xf]
      %v1325 = vld [vmem:[%s1282 + $0xa8] sm:$0xf]
      %v1326 = vld [vmem:[%s1282 + $0xac] sm:$0xf]
      %v1327 = vld [vmem:[%s1282 + $0xb0] sm:$0xf]
      %v1328 = vld [vmem:[%s1282 + $0xb4] sm:$0xf]
      %v1329 = vld [vmem:[%s1282 + $0xb8] sm:$0xf]
      %v1330 = vld [vmem:[%s1282 + $0xbc] sm:$0xf]
      %v1331 = vld [vmem:[%s1282 + $0xc0] sm:$0xf]
      %v1332 = vld [vmem:[%s1282 + $0xc4] sm:$0xf]
      %v1333 = vld [vmem:[%s1282 + $0xc8] sm:$0xf]
      %v1334 = vld [vmem:[%s1282 + $0xcc] sm:$0xf]
      %v1335 = vld [vmem:[%s1282 + $0xd0] sm:$0xf]
      %v1336 = vld [vmem:[%s1282 + $0xd4] sm:$0xf]
      %v1337 = vld [vmem:[%s1282 + $0xd8] sm:$0xf]
      %v1338 = vld [vmem:[%s1282 + $0xdc] sm:$0xf]
      %v1339 = vld [vmem:[%s1282 + $0xe0] sm:$0xf]
      %v1340 = vld [vmem:[%s1282 + $0xe4] sm:$0xf]
      %v1341 = vld [vmem:[%s1282 + $0xe8] sm:$0xf]
      %v1342 = vld [vmem:[%s1282 + $0xec] sm:$0xf]
      %v1343 = vld [vmem:[%s1282 + $0xf0] sm:$0xf]
      %v1344 = vld [vmem:[%s1282 + $0xf4] sm:$0xf]
      %v1345 = vld [vmem:[%s1282 + $0xf8] sm:$0xf]
      %v1346 = vld [vmem:[%s1282 + $0xfc] sm:$0xf]
      %v1347 = vld [vmem:[%s1282 + $0x100] sm:$0xf]
      %v1348 = vld [vmem:[%s1282 + $0x104] sm:$0xf]
      %v1349 = vld [vmem:[%s1282 + $0x108] sm:$0xf]
      %v1350 = vld [vmem:[%s1282 + $0x10c] sm:$0xf]
      %v1351 = vld [vmem:[%s1282 + $0x110] sm:$0xf]
      %v1352 = vld [vmem:[%s1282 + $0x114] sm:$0xf]
      %v1353 = vld [vmem:[%s1282 + $0x118] sm:$0xf]
      %v1354 = vld [vmem:[%s1282 + $0x11c] sm:$0xf]
      %v1355 = vld [vmem:[%s1282 + $0x120] sm:$0xf]
      %v1356 = vld [vmem:[%s1282 + $0x124] sm:$0xf]
      %v1357 = vld [vmem:[%s1282 + $0x128] sm:$0xf]
      %v1358 = vld [vmem:[%s1282 + $0x12c] sm:$0xf]
      %v1359 = vld [vmem:[%s1282 + $0x130] sm:$0xf]
      %v1360 = vld [vmem:[%s1282 + $0x134] sm:$0xf]
      %v1361 = vld [vmem:[%s1282 + $0x138] sm:$0xf]
      %v1362 = vld [vmem:[%s1282 + $0x13c] sm:$0xf]
      %v1363 = vld [vmem:[%s1282 + $0x140] sm:$0xf]
      %v1364 = vld [vmem:[%s1282 + $0x144] sm:$0xf]
      %v1365 = vld [vmem:[%s1282 + $0x148] sm:$0xf]
      %v1366 = vld [vmem:[%s1282 + $0x14c] sm:$0xf]
      %v1367 = vld [vmem:[%s1282 + $0x150] sm:$0xf]
      %v1368 = vld [vmem:[%s1282 + $0x154] sm:$0xf]
      %v1369 = vld [vmem:[%s1282 + $0x158] sm:$0xf]
      %v1370 = vld [vmem:[%s1282 + $0x15c] sm:$0xf]
      %v1371 = vld [vmem:[%s1282 + $0x160] sm:$0xf]
      %v1372 = vld [vmem:[%s1282 + $0x164] sm:$0xf]
      %v1373 = vld [vmem:[%s1282 + $0x168] sm:$0xf]
      %v1374 = vld [vmem:[%s1282 + $0x16c] sm:$0xf]
      %v1375 = vld [vmem:[%s1282 + $0x170] sm:$0xf]
      %v1376 = vld [vmem:[%s1282 + $0x174] sm:$0xf]
      %v1377 = vld [vmem:[%s1282 + $0x178] sm:$0xf]
      %v1378 = vld [vmem:[%s1282 + $0x17c] sm:$0xf]
      %v1379 = vlaneseq
      %v1380 = vshrl.u32 %v1379, 7
      %v1381 = vsub.s32 2, %v1380
      %v1382 = vrot.slane %v176, %v1381
      %v1479 = vunpack.c.l.b16 %v1283
      %v1480 = vunpack.c.l.b16 %v1284
      %v1481 = vunpack.c.l.b16 %v1285
      %v1482 = vunpack.c.l.b16 %v1286
      %v1483 = vunpack.c.l.b16 %v1287
      %v1484 = vunpack.c.l.b16 %v1288
      %v1485 = vunpack.c.l.b16 %v1289
      %v1486 = vunpack.c.l.b16 %v1290
      %v1487 = vunpack.c.l.b16 %v1291
      %v1488 = vunpack.c.l.b16 %v1292
      %v1489 = vunpack.c.l.b16 %v1293
      %v1490 = vunpack.c.l.b16 %v1294
      %v1491 = vunpack.c.l.b16 %v1295
      %v1492 = vunpack.c.l.b16 %v1296
      %v1493 = vunpack.c.l.b16 %v1297
      %v1494 = vunpack.c.l.b16 %v1298
      %v1495 = vunpack.c.l.b16 %v1299
      %v1496 = vunpack.c.l.b16 %v1300
      %v1497 = vunpack.c.l.b16 %v1301
      %v1498 = vunpack.c.l.b16 %v1302
      %v1499 = vunpack.c.l.b16 %v1303
      %v1500 = vunpack.c.l.b16 %v1304
      %v1501 = vunpack.c.l.b16 %v1305
      %v1502 = vunpack.c.l.b16 %v1306
      %v1503 = vunpack.c.l.b16 %v1307
      %v1504 = vunpack.c.l.b16 %v1308
      %v1505 = vunpack.c.l.b16 %v1309
      %v1506 = vunpack.c.l.b16 %v1310
      %v1507 = vunpack.c.l.b16 %v1311
      %v1508 = vunpack.c.l.b16 %v1312
      %v1509 = vunpack.c.l.b16 %v1313
      %v1510 = vunpack.c.l.b16 %v1314
      %v1511 = vunpack.c.l.b16 %v1315
      %v1512 = vunpack.c.l.b16 %v1316
      %v1513 = vunpack.c.l.b16 %v1317
      %v1514 = vunpack.c.l.b16 %v1318
      %v1515 = vunpack.c.l.b16 %v1319
      %v1516 = vunpack.c.l.b16 %v1320
      %v1517 = vunpack.c.l.b16 %v1321
      %v1518 = vunpack.c.l.b16 %v1322
      %v1519 = vunpack.c.l.b16 %v1323
      %v1520 = vunpack.c.l.b16 %v1324
      %v1521 = vunpack.c.l.b16 %v1325
      %v1522 = vunpack.c.l.b16 %v1326
      %v1523 = vunpack.c.l.b16 %v1327
      %v1524 = vunpack.c.l.b16 %v1328
      %v1525 = vunpack.c.l.b16 %v1329
      %v1526 = vunpack.c.l.b16 %v1330
      %v1527 = vunpack.c.l.b16 %v1331
      %v1528 = vunpack.c.l.b16 %v1332
      %v1529 = vunpack.c.l.b16 %v1333
      %v1530 = vunpack.c.l.b16 %v1334
      %v1531 = vunpack.c.l.b16 %v1335
      %v1532 = vunpack.c.l.b16 %v1336
      %v1533 = vunpack.c.l.b16 %v1337
      %v1534 = vunpack.c.l.b16 %v1338
      %v1535 = vunpack.c.l.b16 %v1339
      %v1536 = vunpack.c.l.b16 %v1340
      %v1537 = vunpack.c.l.b16 %v1341
      %v1538 = vunpack.c.l.b16 %v1342
      %v1539 = vunpack.c.l.b16 %v1343
      %v1540 = vunpack.c.l.b16 %v1344
      %v1541 = vunpack.c.l.b16 %v1345
      %v1542 = vunpack.c.l.b16 %v1346
      %v1543 = vunpack.c.l.b16 %v1347
      %v1544 = vunpack.c.l.b16 %v1348
      %v1545 = vunpack.c.l.b16 %v1349
      %v1546 = vunpack.c.l.b16 %v1350
      %v1547 = vunpack.c.l.b16 %v1351
      %v1548 = vunpack.c.l.b16 %v1352
      %v1549 = vunpack.c.l.b16 %v1353
      %v1550 = vunpack.c.l.b16 %v1354
      %v1551 = vunpack.c.l.b16 %v1355
      %v1552 = vunpack.c.l.b16 %v1356
      %v1553 = vunpack.c.l.b16 %v1357
      %v1554 = vunpack.c.l.b16 %v1358
      %v1555 = vunpack.c.l.b16 %v1359
      %v1556 = vunpack.c.l.b16 %v1360
      %v1557 = vunpack.c.l.b16 %v1361
      %v1558 = vunpack.c.l.b16 %v1362
      %v1559 = vunpack.c.l.b16 %v1363
      %v1560 = vunpack.c.l.b16 %v1364
      %v1561 = vunpack.c.l.b16 %v1365
      %v1562 = vunpack.c.l.b16 %v1366
      %v1563 = vunpack.c.l.b16 %v1367
      %v1564 = vunpack.c.l.b16 %v1368
      %v1565 = vunpack.c.l.b16 %v1369
      %v1566 = vunpack.c.l.b16 %v1370
      %v1567 = vunpack.c.l.b16 %v1371
      %v1568 = vunpack.c.l.b16 %v1372
      %v1569 = vunpack.c.l.b16 %v1373
      %v1570 = vunpack.c.l.b16 %v1374
      %v1571 = vunpack.c.l.b16 %v1375
      %v1572 = vunpack.c.l.b16 %v1376
      %v1573 = vunpack.c.l.b16 %v1377
      %v1574 = vunpack.c.l.b16 %v1378
      %v1575 = vpack.c.b16 %v1480, %v1479
      %v1576 = vpack.c.b16 %v1482, %v1481
      %v1577 = vpack.c.b16 %v1484, %v1483
      %v1578 = vpack.c.b16 %v1486, %v1485
      %v1579 = vpack.c.b16 %v1488, %v1487
      %v1580 = vpack.c.b16 %v1490, %v1489
      %v1581 = vpack.c.b16 %v1492, %v1491
      %v1582 = vpack.c.b16 %v1494, %v1493
      %v1583 = vpack.c.b16 %v1496, %v1495
      %v1584 = vpack.c.b16 %v1498, %v1497
      %v1585 = vpack.c.b16 %v1500, %v1499
      %v1586 = vpack.c.b16 %v1502, %v1501
      %v1587 = vpack.c.b16 %v1504, %v1503
      %v1588 = vpack.c.b16 %v1506, %v1505
      %v1589 = vpack.c.b16 %v1508, %v1507
      %v1590 = vpack.c.b16 %v1510, %v1509
      %v1591 = vpack.c.b16 %v1512, %v1511
      %v1592 = vpack.c.b16 %v1514, %v1513
      %v1593 = vpack.c.b16 %v1516, %v1515
      %v1594 = vpack.c.b16 %v1518, %v1517
      %v1595 = vpack.c.b16 %v1520, %v1519
      %v1596 = vpack.c.b16 %v1522, %v1521
      %v1597 = vpack.c.b16 %v1524, %v1523
      %v1598 = vpack.c.b16 %v1526, %v1525
      %v1599 = vpack.c.b16 %v1528, %v1527
      %v1600 = vpack.c.b16 %v1530, %v1529
      %v1601 = vpack.c.b16 %v1532, %v1531
      %v1602 = vpack.c.b16 %v1534, %v1533
      %v1603 = vpack.c.b16 %v1536, %v1535
      %v1604 = vpack.c.b16 %v1538, %v1537
      %v1605 = vpack.c.b16 %v1540, %v1539
      %v1606 = vpack.c.b16 %v1542, %v1541
      %v1607 = vpack.c.b16 %v1544, %v1543
      %v1608 = vpack.c.b16 %v1546, %v1545
      %v1609 = vpack.c.b16 %v1548, %v1547
      %v1610 = vpack.c.b16 %v1550, %v1549
      %v1611 = vpack.c.b16 %v1552, %v1551
      %v1612 = vpack.c.b16 %v1554, %v1553
      %v1613 = vpack.c.b16 %v1556, %v1555
      %v1614 = vpack.c.b16 %v1558, %v1557
      %v1615 = vpack.c.b16 %v1560, %v1559
      %v1616 = vpack.c.b16 %v1562, %v1561
      %v1617 = vpack.c.b16 %v1564, %v1563
      %v1618 = vpack.c.b16 %v1566, %v1565
      %v1619 = vpack.c.b16 %v1568, %v1567
      %v1620 = vpack.c.b16 %v1570, %v1569
      %v1621 = vpack.c.b16 %v1572, %v1571
      %v1622 = vpack.c.b16 %v1574, %v1573
      %1671 = vmatprep.subr.bf16.mxu0 0
      %1672 = vmatpush1.bf16.msra.mxu0 %v1575
      %1673 = vmatprep.subr.bf16.mxu0 0
      %1674 = vmatpush1.bf16.msra.mxu0 %v1576
      %1675 = vmatprep.subr.bf16.mxu0 0
      %1676 = vmatpush1.bf16.msra.mxu0 %v1577
      %1677 = vmatprep.subr.bf16.mxu0 0
      %1678 = vmatpush1.bf16.msra.mxu0 %v1578
      %1679 = vmatprep.subr.bf16.mxu0 0
      %1680 = vmatpush1.bf16.msra.mxu0 %v1579
      %1681 = vmatprep.subr.bf16.mxu0 0
      %1682 = vmatpush1.bf16.msra.mxu0 %v1580
      %1683 = vmatprep.subr.bf16.mxu0 0
      %1684 = vmatpush1.bf16.msra.mxu0 %v1581
      %1685 = vmatprep.subr.bf16.mxu0 0
      %1686 = vmatpush1.bf16.msra.mxu0 %v1582
      %1687 = vmatprep.subr.bf16.mxu0 0
      %1688 = vmatpush1.bf16.msra.mxu0 %v1583
      %1689 = vmatprep.subr.bf16.mxu0 0
      %1690 = vmatpush1.bf16.msra.mxu0 %v1584
      %1691 = vmatprep.subr.bf16.mxu0 0
      %1692 = vmatpush1.bf16.msra.mxu0 %v1585
      %1693 = vmatprep.subr.bf16.mxu0 0
      %1694 = vmatpush1.bf16.msra.mxu0 %v1586
      %1695 = vmatprep.subr.bf16.mxu0 0
      %1696 = vmatpush1.bf16.msra.mxu0 %v1587
      %1697 = vmatprep.subr.bf16.mxu0 0
      %1698 = vmatpush1.bf16.msra.mxu0 %v1588
      %1699 = vmatprep.subr.bf16.mxu0 0
      %1700 = vmatpush1.bf16.msra.mxu0 %v1589
      %1701 = vmatprep.subr.bf16.mxu0 0
      %1702 = vmatpush1.bf16.msra.mxu0 %v1590
      %1703 = vmatprep.mubr.bf16.mxu0 %v1277
      %1704 = vmatmul.mubr.bf16.gmra.mrb[0].mxu0 %v1276
      %v1705 = vpop.f32.mrb[0].mxu0
      %v1706 = vadd.f32 %v1382, %v1705
      %v1707 = vpop.f32.mrb[0].mxu0
      %v1708 = vpop.f32.mrb[0].mxu0
      %v1709 = vpop.f32.mrb[0].mxu0
      %1710 = vdwg.mxu0
      %1711 = vmatprep.subr.bf16.mxu0 0
      %1712 = vmatpush1.bf16.msra.mxu0 %v1591
      %1713 = vmatprep.subr.bf16.mxu0 0
      %1714 = vmatpush1.bf16.msra.mxu0 %v1592
      %1715 = vmatprep.subr.bf16.mxu0 0
      %1716 = vmatpush1.bf16.msra.mxu0 %v1593
      %1717 = vmatprep.subr.bf16.mxu0 0
      %1718 = vmatpush1.bf16.msra.mxu0 %v1594
      %1719 = vmatprep.subr.bf16.mxu0 0
      %1720 = vmatpush1.bf16.msra.mxu0 %v1595
      %1721 = vmatprep.subr.bf16.mxu0 0
      %1722 = vmatpush1.bf16.msra.mxu0 %v1596
      %1723 = vmatprep.subr.bf16.mxu0 0
      %1724 = vmatpush1.bf16.msra.mxu0 %v1597
      %1725 = vmatprep.subr.bf16.mxu0 0
      %1726 = vmatpush1.bf16.msra.mxu0 %v1598
      %1727 = vmatprep.subr.bf16.mxu0 0
      %1728 = vmatpush1.bf16.msra.mxu0 %v1599
      %1729 = vmatprep.subr.bf16.mxu0 0
      %1730 = vmatpush1.bf16.msra.mxu0 %v1600
      %1731 = vmatprep.subr.bf16.mxu0 0
      %1732 = vmatpush1.bf16.msra.mxu0 %v1601
      %1733 = vmatprep.subr.bf16.mxu0 0
      %1734 = vmatpush1.bf16.msra.mxu0 %v1602
      %1735 = vmatprep.subr.bf16.mxu0 0
      %1736 = vmatpush1.bf16.msra.mxu0 %v1603
      %1737 = vmatprep.subr.bf16.mxu0 0
      %1738 = vmatpush1.bf16.msra.mxu0 %v1604
      %1739 = vmatprep.subr.bf16.mxu0 0
      %1740 = vmatpush1.bf16.msra.mxu0 %v1605
      %1741 = vmatprep.subr.bf16.mxu0 0
      %1742 = vmatpush1.bf16.msra.mxu0 %v1606
      %1743 = vmatprep.mubr.bf16.mxu0 %v1279
      %1744 = vmatmul.mubr.bf16.gmra.mrb[0].mxu0 %v1278
      %v1745 = vpop.f32.mrb[0].mxu0
      %v1746 = vadd.f32 %v1706, %v1745
      %v1747 = vpop.f32.mrb[0].mxu0
      %v1748 = vpop.f32.mrb[0].mxu0
      %v1749 = vpop.f32.mrb[0].mxu0
      %1750 = vdwg.mxu0
      %1751 = vmatprep.subr.bf16.mxu0 0
      %1752 = vmatpush1.bf16.msra.mxu0 %v1607
      %1753 = vmatprep.subr.bf16.mxu0 0
      %1754 = vmatpush1.bf16.msra.mxu0 %v1608
      %1755 = vmatprep.subr.bf16.mxu0 0
      %1756 = vmatpush1.bf16.msra.mxu0 %v1609
      %1757 = vmatprep.subr.bf16.mxu0 0
      %1758 = vmatpush1.bf16.msra.mxu0 %v1610
      %1759 = vmatprep.subr.bf16.mxu0 0
      %1760 = vmatpush1.bf16.msra.mxu0 %v1611
      %1761 = vmatprep.subr.bf16.mxu0 0
      %1762 = vmatpush1.bf16.msra.mxu0 %v1612
      %1763 = vmatprep.subr.bf16.mxu0 0
      %1764 = vmatpush1.bf16.msra.mxu0 %v1613
      %1765 = vmatprep.subr.bf16.mxu0 0
      %1766 = vmatpush1.bf16.msra.mxu0 %v1614
      %1767 = vmatprep.subr.bf16.mxu0 0
      %1768 = vmatpush1.bf16.msra.mxu0 %v1615
      %1769 = vmatprep.subr.bf16.mxu0 0
      %1770 = vmatpush1.bf16.msra.mxu0 %v1616
      %1771 = vmatprep.subr.bf16.mxu0 0
      %1772 = vmatpush1.bf16.msra.mxu0 %v1617
      %1773 = vmatprep.subr.bf16.mxu0 0
      %1774 = vmatpush1.bf16.msra.mxu0 %v1618
      %1775 = vmatprep.subr.bf16.mxu0 0
      %1776 = vmatpush1.bf16.msra.mxu0 %v1619
      %1777 = vmatprep.subr.bf16.mxu0 0
      %1778 = vmatpush1.bf16.msra.mxu0 %v1620
      %1779 = vmatprep.subr.bf16.mxu0 0
      %1780 = vmatpush1.bf16.msra.mxu0 %v1621
      %1781 = vmatprep.subr.bf16.mxu0 0
      %1782 = vmatpush1.bf16.msra.mxu0 %v1622
      %1783 = vmatprep.mubr.bf16.mxu0 %v1281
      %1784 = vmatmul.mubr.bf16.gmra.mrb[0].mxu0 %v1280
      %v1785 = vpop.f32.mrb[0].mxu0
      %v1786 = vadd.f32 %v1746, %v1785
      %v1787 = vpop.f32.mrb[0].mxu0
      %v1788 = vpop.f32.mrb[0].mxu0
      %v1789 = vpop.f32.mrb[0].mxu0
      %1790 = vdwg.mxu0
      %v1791 = vmax.f32 %v1786, 0.0
      %vm1792 = vcmask 1046528
      %v1793 = vsel %vm1792, %v1791, -inf
      %v1794 = vrot.slane %v1793, 4
      %v1795 = vmax.f32 %v1793, %v1794
      %v1796 = vrot.slane %v1795, 2
      %v1797 = vmax.f32 %v1795, %v1796
      %v1798 = vrot.slane %v1797, 1
      %v1799 = vmax.f32 %v1797, %v1798
      %1800 = vst [vmem:[%s168 + $0x2] sm:$0x1] %v1799
      %1801 = vst [vmem:[#allocation2] sm:$0xff] 0.0
      %1802 = vst [vmem:[#allocation2 + $0x8] sm:$0xff] 0.0
      %1803 = vst [vmem:[#allocation2 + $0x10] sm:$0x3] 0.0
      %1804 = vst [vmem:[#allocation2 + $0x1] sm:$0x7f] %v1791
      %v1805 = vld [vmem:[#allocation2] sm:$0xf]
      %v1806 = vld [vmem:[#allocation2 + $0x1] sm:$0xf]
      %v1807 = vld [vmem:[#allocation2 + $0x2] sm:$0xf]
      %v1808 = vld [vmem:[#allocation2 + $0x3] sm:$0xf]
      %v1809 = vld [vmem:[#allocation2 + $0x4] sm:$0xf]
      %v1810 = vld [vmem:[#allocation2 + $0x5] sm:$0xf]
      %v1811 = vpack.c.bf16 %v1805, %v1805
      %v1812 = vpack.c.bf16 %v1806, %v1806
      %v1813 = vpack.c.bf16 %v1807, %v1807
      %v1814 = vpack.c.bf16 %v1808, %v1808
      %v1815 = vpack.c.bf16 %v1809, %v1809
      %v1816 = vpack.c.bf16 %v1810, %v1810
      %s1817 = scalar_lea.vmem %s1, 1152
      %v1818 = vld [vmem:[%s1817] sm:$0xf]
      %v1819 = vld [vmem:[%s1817 + $0x4] sm:$0xf]
      %v1820 = vld [vmem:[%s1817 + $0x8] sm:$0xf]
      %v1821 = vld [vmem:[%s1817 + $0xc] sm:$0xf]
      %v1822 = vld [vmem:[%s1817 + $0x10] sm:$0xf]
      %v1823 = vld [vmem:[%s1817 + $0x14] sm:$0xf]
      %v1824 = vld [vmem:[%s1817 + $0x18] sm:$0xf]
      %v1825 = vld [vmem:[%s1817 + $0x1c] sm:$0xf]
      %v1826 = vld [vmem:[%s1817 + $0x20] sm:$0xf]
      %v1827 = vld [vmem:[%s1817 + $0x24] sm:$0xf]
      %v1828 = vld [vmem:[%s1817 + $0x28] sm:$0xf]
      %v1829 = vld [vmem:[%s1817 + $0x2c] sm:$0xf]
      %v1830 = vld [vmem:[%s1817 + $0x30] sm:$0xf]
      %v1831 = vld [vmem:[%s1817 + $0x34] sm:$0xf]
      %v1832 = vld [vmem:[%s1817 + $0x38] sm:$0xf]
      %v1833 = vld [vmem:[%s1817 + $0x3c] sm:$0xf]
      %v1834 = vld [vmem:[%s1817 + $0x40] sm:$0xf]
      %v1835 = vld [vmem:[%s1817 + $0x44] sm:$0xf]
      %v1836 = vld [vmem:[%s1817 + $0x48] sm:$0xf]
      %v1837 = vld [vmem:[%s1817 + $0x4c] sm:$0xf]
      %v1838 = vld [vmem:[%s1817 + $0x50] sm:$0xf]
      %v1839 = vld [vmem:[%s1817 + $0x54] sm:$0xf]
      %v1840 = vld [vmem:[%s1817 + $0x58] sm:$0xf]
      %v1841 = vld [vmem:[%s1817 + $0x5c] sm:$0xf]
      %v1842 = vld [vmem:[%s1817 + $0x60] sm:$0xf]
      %v1843 = vld [vmem:[%s1817 + $0x64] sm:$0xf]
      %v1844 = vld [vmem:[%s1817 + $0x68] sm:$0xf]
      %v1845 = vld [vmem:[%s1817 + $0x6c] sm:$0xf]
      %v1846 = vld [vmem:[%s1817 + $0x70] sm:$0xf]
      %v1847 = vld [vmem:[%s1817 + $0x74] sm:$0xf]
      %v1848 = vld [vmem:[%s1817 + $0x78] sm:$0xf]
      %v1849 = vld [vmem:[%s1817 + $0x7c] sm:$0xf]
      %v1850 = vld [vmem:[%s1817 + $0x80] sm:$0xf]
      %v1851 = vld [vmem:[%s1817 + $0x84] sm:$0xf]
      %v1852 = vld [vmem:[%s1817 + $0x88] sm:$0xf]
      %v1853 = vld [vmem:[%s1817 + $0x8c] sm:$0xf]
      %v1854 = vld [vmem:[%s1817 + $0x90] sm:$0xf]
      %v1855 = vld [vmem:[%s1817 + $0x94] sm:$0xf]
      %v1856 = vld [vmem:[%s1817 + $0x98] sm:$0xf]
      %v1857 = vld [vmem:[%s1817 + $0x9c] sm:$0xf]
      %v1858 = vld [vmem:[%s1817 + $0xa0] sm:$0xf]
      %v1859 = vld [vmem:[%s1817 + $0xa4] sm:$0xf]
      %v1860 = vld [vmem:[%s1817 + $0xa8] sm:$0xf]
      %v1861 = vld [vmem:[%s1817 + $0xac] sm:$0xf]
      %v1862 = vld [vmem:[%s1817 + $0xb0] sm:$0xf]
      %v1863 = vld [vmem:[%s1817 + $0xb4] sm:$0xf]
      %v1864 = vld [vmem:[%s1817 + $0xb8] sm:$0xf]
      %v1865 = vld [vmem:[%s1817 + $0xbc] sm:$0xf]
      %v1866 = vld [vmem:[%s1817 + $0xc0] sm:$0xf]
      %v1867 = vld [vmem:[%s1817 + $0xc4] sm:$0xf]
      %v1868 = vld [vmem:[%s1817 + $0xc8] sm:$0xf]
      %v1869 = vld [vmem:[%s1817 + $0xcc] sm:$0xf]
      %v1870 = vld [vmem:[%s1817 + $0xd0] sm:$0xf]
      %v1871 = vld [vmem:[%s1817 + $0xd4] sm:$0xf]
      %v1872 = vld [vmem:[%s1817 + $0xd8] sm:$0xf]
      %v1873 = vld [vmem:[%s1817 + $0xdc] sm:$0xf]
      %v1874 = vld [vmem:[%s1817 + $0xe0] sm:$0xf]
      %v1875 = vld [vmem:[%s1817 + $0xe4] sm:$0xf]
      %v1876 = vld [vmem:[%s1817 + $0xe8] sm:$0xf]
      %v1877 = vld [vmem:[%s1817 + $0xec] sm:$0xf]
      %v1878 = vld [vmem:[%s1817 + $0xf0] sm:$0xf]
      %v1879 = vld [vmem:[%s1817 + $0xf4] sm:$0xf]
      %v1880 = vld [vmem:[%s1817 + $0xf8] sm:$0xf]
      %v1881 = vld [vmem:[%s1817 + $0xfc] sm:$0xf]
      %v1882 = vld [vmem:[%s1817 + $0x100] sm:$0xf]
      %v1883 = vld [vmem:[%s1817 + $0x104] sm:$0xf]
      %v1884 = vld [vmem:[%s1817 + $0x108] sm:$0xf]
      %v1885 = vld [vmem:[%s1817 + $0x10c] sm:$0xf]
      %v1886 = vld [vmem:[%s1817 + $0x110] sm:$0xf]
      %v1887 = vld [vmem:[%s1817 + $0x114] sm:$0xf]
      %v1888 = vld [vmem:[%s1817 + $0x118] sm:$0xf]
      %v1889 = vld [vmem:[%s1817 + $0x11c] sm:$0xf]
      %v1890 = vld [vmem:[%s1817 + $0x120] sm:$0xf]
      %v1891 = vld [vmem:[%s1817 + $0x124] sm:$0xf]
      %v1892 = vld [vmem:[%s1817 + $0x128] sm:$0xf]
      %v1893 = vld [vmem:[%s1817 + $0x12c] sm:$0xf]
      %v1894 = vld [vmem:[%s1817 + $0x130] sm:$0xf]
      %v1895 = vld [vmem:[%s1817 + $0x134] sm:$0xf]
      %v1896 = vld [vmem:[%s1817 + $0x138] sm:$0xf]
      %v1897 = vld [vmem:[%s1817 + $0x13c] sm:$0xf]
      %v1898 = vld [vmem:[%s1817 + $0x140] sm:$0xf]
      %v1899 = vld [vmem:[%s1817 + $0x144] sm:$0xf]
      %v1900 = vld [vmem:[%s1817 + $0x148] sm:$0xf]
      %v1901 = vld [vmem:[%s1817 + $0x14c] sm:$0xf]
      %v1902 = vld [vmem:[%s1817 + $0x150] sm:$0xf]
      %v1903 = vld [vmem:[%s1817 + $0x154] sm:$0xf]
      %v1904 = vld [vmem:[%s1817 + $0x158] sm:$0xf]
      %v1905 = vld [vmem:[%s1817 + $0x15c] sm:$0xf]
      %v1906 = vld [vmem:[%s1817 + $0x160] sm:$0xf]
      %v1907 = vld [vmem:[%s1817 + $0x164] sm:$0xf]
      %v1908 = vld [vmem:[%s1817 + $0x168] sm:$0xf]
      %v1909 = vld [vmem:[%s1817 + $0x16c] sm:$0xf]
      %v1910 = vld [vmem:[%s1817 + $0x170] sm:$0xf]
      %v1911 = vld [vmem:[%s1817 + $0x174] sm:$0xf]
      %v1912 = vld [vmem:[%s1817 + $0x178] sm:$0xf]
      %v1913 = vld [vmem:[%s1817 + $0x17c] sm:$0xf]
      %v1914 = vlaneseq
      %v1915 = vshrl.u32 %v1914, 7
      %v1916 = vsub.s32 3, %v1915
      %v1917 = vrot.slane %v176, %v1916
      %v2014 = vunpack.c.l.b16 %v1818
      %v2015 = vunpack.c.l.b16 %v1819
      %v2016 = vunpack.c.l.b16 %v1820
      %v2017 = vunpack.c.l.b16 %v1821
      %v2018 = vunpack.c.l.b16 %v1822
      %v2019 = vunpack.c.l.b16 %v1823
      %v2020 = vunpack.c.l.b16 %v1824
      %v2021 = vunpack.c.l.b16 %v1825
      %v2022 = vunpack.c.l.b16 %v1826
      %v2023 = vunpack.c.l.b16 %v1827
      %v2024 = vunpack.c.l.b16 %v1828
      %v2025 = vunpack.c.l.b16 %v1829
      %v2026 = vunpack.c.l.b16 %v1830
      %v2027 = vunpack.c.l.b16 %v1831
      %v2028 = vunpack.c.l.b16 %v1832
      %v2029 = vunpack.c.l.b16 %v1833
      %v2030 = vunpack.c.l.b16 %v1834
      %v2031 = vunpack.c.l.b16 %v1835
      %v2032 = vunpack.c.l.b16 %v1836
      %v2033 = vunpack.c.l.b16 %v1837
      %v2034 = vunpack.c.l.b16 %v1838
      %v2035 = vunpack.c.l.b16 %v1839
      %v2036 = vunpack.c.l.b16 %v1840
      %v2037 = vunpack.c.l.b16 %v1841
      %v2038 = vunpack.c.l.b16 %v1842
      %v2039 = vunpack.c.l.b16 %v1843
      %v2040 = vunpack.c.l.b16 %v1844
      %v2041 = vunpack.c.l.b16 %v1845
      %v2042 = vunpack.c.l.b16 %v1846
      %v2043 = vunpack.c.l.b16 %v1847
      %v2044 = vunpack.c.l.b16 %v1848
      %v2045 = vunpack.c.l.b16 %v1849
      %v2046 = vunpack.c.l.b16 %v1850
      %v2047 = vunpack.c.l.b16 %v1851
      %v2048 = vunpack.c.l.b16 %v1852
      %v2049 = vunpack.c.l.b16 %v1853
      %v2050 = vunpack.c.l.b16 %v1854
      %v2051 = vunpack.c.l.b16 %v1855
      %v2052 = vunpack.c.l.b16 %v1856
      %v2053 = vunpack.c.l.b16 %v1857
      %v2054 = vunpack.c.l.b16 %v1858
      %v2055 = vunpack.c.l.b16 %v1859
      %v2056 = vunpack.c.l.b16 %v1860
      %v2057 = vunpack.c.l.b16 %v1861
      %v2058 = vunpack.c.l.b16 %v1862
      %v2059 = vunpack.c.l.b16 %v1863
      %v2060 = vunpack.c.l.b16 %v1864
      %v2061 = vunpack.c.l.b16 %v1865
      %v2062 = vunpack.c.l.b16 %v1866
      %v2063 = vunpack.c.l.b16 %v1867
      %v2064 = vunpack.c.l.b16 %v1868
      %v2065 = vunpack.c.l.b16 %v1869
      %v2066 = vunpack.c.l.b16 %v1870
      %v2067 = vunpack.c.l.b16 %v1871
      %v2068 = vunpack.c.l.b16 %v1872
      %v2069 = vunpack.c.l.b16 %v1873
      %v2070 = vunpack.c.l.b16 %v1874
      %v2071 = vunpack.c.l.b16 %v1875
      %v2072 = vunpack.c.l.b16 %v1876
      %v2073 = vunpack.c.l.b16 %v1877
      %v2074 = vunpack.c.l.b16 %v1878
      %v2075 = vunpack.c.l.b16 %v1879
      %v2076 = vunpack.c.l.b16 %v1880
      %v2077 = vunpack.c.l.b16 %v1881
      %v2078 = vunpack.c.l.b16 %v1882
      %v2079 = vunpack.c.l.b16 %v1883
      %v2080 = vunpack.c.l.b16 %v1884
      %v2081 = vunpack.c.l.b16 %v1885
      %v2082 = vunpack.c.l.b16 %v1886
      %v2083 = vunpack.c.l.b16 %v1887
      %v2084 = vunpack.c.l.b16 %v1888
      %v2085 = vunpack.c.l.b16 %v1889
      %v2086 = vunpack.c.l.b16 %v1890
      %v2087 = vunpack.c.l.b16 %v1891
      %v2088 = vunpack.c.l.b16 %v1892
      %v2089 = vunpack.c.l.b16 %v1893
      %v2090 = vunpack.c.l.b16 %v1894
      %v2091 = vunpack.c.l.b16 %v1895
      %v2092 = vunpack.c.l.b16 %v1896
      %v2093 = vunpack.c.l.b16 %v1897
      %v2094 = vunpack.c.l.b16 %v1898
      %v2095 = vunpack.c.l.b16 %v1899
      %v2096 = vunpack.c.l.b16 %v1900
      %v2097 = vunpack.c.l.b16 %v1901
      %v2098 = vunpack.c.l.b16 %v1902
      %v2099 = vunpack.c.l.b16 %v1903
      %v2100 = vunpack.c.l.b16 %v1904
      %v2101 = vunpack.c.l.b16 %v1905
      %v2102 = vunpack.c.l.b16 %v1906
      %v2103 = vunpack.c.l.b16 %v1907
      %v2104 = vunpack.c.l.b16 %v1908
      %v2105 = vunpack.c.l.b16 %v1909
      %v2106 = vunpack.c.l.b16 %v1910
      %v2107 = vunpack.c.l.b16 %v1911
      %v2108 = vunpack.c.l.b16 %v1912
      %v2109 = vunpack.c.l.b16 %v1913
      %v2110 = vpack.c.b16 %v2015, %v2014
      %v2111 = vpack.c.b16 %v2017, %v2016
      %v2112 = vpack.c.b16 %v2019, %v2018
      %v2113 = vpack.c.b16 %v2021, %v2020
      %v2114 = vpack.c.b16 %v2023, %v2022
      %v2115 = vpack.c.b16 %v2025, %v2024
      %v2116 = vpack.c.b16 %v2027, %v2026
      %v2117 = vpack.c.b16 %v2029, %v2028
      %v2118 = vpack.c.b16 %v2031, %v2030
      %v2119 = vpack.c.b16 %v2033, %v2032
      %v2120 = vpack.c.b16 %v2035, %v2034
      %v2121 = vpack.c.b16 %v2037, %v2036
      %v2122 = vpack.c.b16 %v2039, %v2038
      %v2123 = vpack.c.b16 %v2041, %v2040
      %v2124 = vpack.c.b16 %v2043, %v2042
      %v2125 = vpack.c.b16 %v2045, %v2044
      %v2126 = vpack.c.b16 %v2047, %v2046
      %v2127 = vpack.c.b16 %v2049, %v2048
      %v2128 = vpack.c.b16 %v2051, %v2050
      %v2129 = vpack.c.b16 %v2053, %v2052
      %v2130 = vpack.c.b16 %v2055, %v2054
      %v2131 = vpack.c.b16 %v2057, %v2056
      %v2132 = vpack.c.b16 %v2059, %v2058
      %v2133 = vpack.c.b16 %v2061, %v2060
      %v2134 = vpack.c.b16 %v2063, %v2062
      %v2135 = vpack.c.b16 %v2065, %v2064
      %v2136 = vpack.c.b16 %v2067, %v2066
      %v2137 = vpack.c.b16 %v2069, %v2068
      %v2138 = vpack.c.b16 %v2071, %v2070
      %v2139 = vpack.c.b16 %v2073, %v2072
      %v2140 = vpack.c.b16 %v2075, %v2074
      %v2141 = vpack.c.b16 %v2077, %v2076
      %v2142 = vpack.c.b16 %v2079, %v2078
      %v2143 = vpack.c.b16 %v2081, %v2080
      %v2144 = vpack.c.b16 %v2083, %v2082
      %v2145 = vpack.c.b16 %v2085, %v2084
      %v2146 = vpack.c.b16 %v2087, %v2086
      %v2147 = vpack.c.b16 %v2089, %v2088
      %v2148 = vpack.c.b16 %v2091, %v2090
      %v2149 = vpack.c.b16 %v2093, %v2092
      %v2150 = vpack.c.b16 %v2095, %v2094
      %v2151 = vpack.c.b16 %v2097, %v2096
      %v2152 = vpack.c.b16 %v2099, %v2098
      %v2153 = vpack.c.b16 %v2101, %v2100
      %v2154 = vpack.c.b16 %v2103, %v2102
      %v2155 = vpack.c.b16 %v2105, %v2104
      %v2156 = vpack.c.b16 %v2107, %v2106
      %v2157 = vpack.c.b16 %v2109, %v2108
      %2206 = vmatprep.subr.bf16.mxu0 0
      %2207 = vmatpush1.bf16.msra.mxu0 %v2110
      %2208 = vmatprep.subr.bf16.mxu0 0
      %2209 = vmatpush1.bf16.msra.mxu0 %v2111
      %2210 = vmatprep.subr.bf16.mxu0 0
      %2211 = vmatpush1.bf16.msra.mxu0 %v2112
      %2212 = vmatprep.subr.bf16.mxu0 0
      %2213 = vmatpush1.bf16.msra.mxu0 %v2113
      %2214 = vmatprep.subr.bf16.mxu0 0
      %2215 = vmatpush1.bf16.msra.mxu0 %v2114
      %2216 = vmatprep.subr.bf16.mxu0 0
      %2217 = vmatpush1.bf16.msra.mxu0 %v2115
      %2218 = vmatprep.subr.bf16.mxu0 0
      %2219 = vmatpush1.bf16.msra.mxu0 %v2116
      %2220 = vmatprep.subr.bf16.mxu0 0
      %2221 = vmatpush1.bf16.msra.mxu0 %v2117
      %2222 = vmatprep.subr.bf16.mxu0 0
      %2223 = vmatpush1.bf16.msra.mxu0 %v2118
      %2224 = vmatprep.subr.bf16.mxu0 0
      %2225 = vmatpush1.bf16.msra.mxu0 %v2119
      %2226 = vmatprep.subr.bf16.mxu0 0
      %2227 = vmatpush1.bf16.msra.mxu0 %v2120
      %2228 = vmatprep.subr.bf16.mxu0 0
      %2229 = vmatpush1.bf16.msra.mxu0 %v2121
      %2230 = vmatprep.subr.bf16.mxu0 0
      %2231 = vmatpush1.bf16.msra.mxu0 %v2122
      %2232 = vmatprep.subr.bf16.mxu0 0
      %2233 = vmatpush1.bf16.msra.mxu0 %v2123
      %2234 = vmatprep.subr.bf16.mxu0 0
      %2235 = vmatpush1.bf16.msra.mxu0 %v2124
      %2236 = vmatprep.subr.bf16.mxu0 0
      %2237 = vmatpush1.bf16.msra.mxu0 %v2125
      %2238 = vmatprep.mubr.bf16.mxu0 %v1812
      %2239 = vmatmul.mubr.bf16.gmra.mrb[0].mxu0 %v1811
      %v2240 = vpop.f32.mrb[0].mxu0
      %v2241 = vadd.f32 %v1917, %v2240
      %v2242 = vpop.f32.mrb[0].mxu0
      %v2243 = vpop.f32.mrb[0].mxu0
      %v2244 = vpop.f32.mrb[0].mxu0
      %2245 = vdwg.mxu0
      %2246 = vmatprep.subr.bf16.mxu0 0
      %2247 = vmatpush1.bf16.msra.mxu0 %v2126
      %2248 = vmatprep.subr.bf16.mxu0 0
      %2249 = vmatpush1.bf16.msra.mxu0 %v2127
      %2250 = vmatprep.subr.bf16.mxu0 0
      %2251 = vmatpush1.bf16.msra.mxu0 %v2128
      %2252 = vmatprep.subr.bf16.mxu0 0
      %2253 = vmatpush1.bf16.msra.mxu0 %v2129
      %2254 = vmatprep.subr.bf16.mxu0 0
      %2255 = vmatpush1.bf16.msra.mxu0 %v2130
      %2256 = vmatprep.subr.bf16.mxu0 0
      %2257 = vmatpush1.bf16.msra.mxu0 %v2131
      %2258 = vmatprep.subr.bf16.mxu0 0
      %2259 = vmatpush1.bf16.msra.mxu0 %v2132
      %2260 = vmatprep.subr.bf16.mxu0 0
      %2261 = vmatpush1.bf16.msra.mxu0 %v2133
      %2262 = vmatprep.subr.bf16.mxu0 0
      %2263 = vmatpush1.bf16.msra.mxu0 %v2134
      %2264 = vmatprep.subr.bf16.mxu0 0
      %2265 = vmatpush1.bf16.msra.mxu0 %v2135
      %2266 = vmatprep.subr.bf16.mxu0 0
      %2267 = vmatpush1.bf16.msra.mxu0 %v2136
      %2268 = vmatprep.subr.bf16.mxu0 0
      %2269 = vmatpush1.bf16.msra.mxu0 %v2137
      %2270 = vmatprep.subr.bf16.mxu0 0
      %2271 = vmatpush1.bf16.msra.mxu0 %v2138
      %2272 = vmatprep.subr.bf16.mxu0 0
      %2273 = vmatpush1.bf16.msra.mxu0 %v2139
      %2274 = vmatprep.subr.bf16.mxu0 0
      %2275 = vmatpush1.bf16.msra.mxu0 %v2140
      %2276 = vmatprep.subr.bf16.mxu0 0
      %2277 = vmatpush1.bf16.msra.mxu0 %v2141
      %2278 = vmatprep.mubr.bf16.mxu0 %v1814
      %2279 = vmatmul.mubr.bf16.gmra.mrb[0].mxu0 %v1813
      %v2280 = vpop.f32.mrb[0].mxu0
      %v2281 = vadd.f32 %v2241, %v2280
      %v2282 = vpop.f32.mrb[0].mxu0
      %v2283 = vpop.f32.mrb[0].mxu0
      %v2284 = vpop.f32.mrb[0].mxu0
      %2285 = vdwg.mxu0
      %2286 = vmatprep.subr.bf16.mxu0 0
      %2287 = vmatpush1.bf16.msra.mxu0 %v2142
      %2288 = vmatprep.subr.bf16.mxu0 0
      %2289 = vmatpush1.bf16.msra.mxu0 %v2143
      %2290 = vmatprep.subr.bf16.mxu0 0
      %2291 = vmatpush1.bf16.msra.mxu0 %v2144
      %2292 = vmatprep.subr.bf16.mxu0 0
      %2293 = vmatpush1.bf16.msra.mxu0 %v2145
      %2294 = vmatprep.subr.bf16.mxu0 0
      %2295 = vmatpush1.bf16.msra.mxu0 %v2146
      %2296 = vmatprep.subr.bf16.mxu0 0
      %2297 = vmatpush1.bf16.msra.mxu0 %v2147
      %2298 = vmatprep.subr.bf16.mxu0 0
      %2299 = vmatpush1.bf16.msra.mxu0 %v2148
      %2300 = vmatprep.subr.bf16.mxu0 0
      %2301 = vmatpush1.bf16.msra.mxu0 %v2149
      %2302 = vmatprep.subr.bf16.mxu0 0
      %2303 = vmatpush1.bf16.msra.mxu0 %v2150
      %2304 = vmatprep.subr.bf16.mxu0 0
      %2305 = vmatpush1.bf16.msra.mxu0 %v2151
      %2306 = vmatprep.subr.bf16.mxu0 0
      %2307 = vmatpush1.bf16.msra.mxu0 %v2152
      %2308 = vmatprep.subr.bf16.mxu0 0
      %2309 = vmatpush1.bf16.msra.mxu0 %v2153
      %2310 = vmatprep.subr.bf16.mxu0 0
      %2311 = vmatpush1.bf16.msra.mxu0 %v2154
      %2312 = vmatprep.subr.bf16.mxu0 0
      %2313 = vmatpush1.bf16.msra.mxu0 %v2155
      %2314 = vmatprep.subr.bf16.mxu0 0
      %2315 = vmatpush1.bf16.msra.mxu0 %v2156
      %2316 = vmatprep.subr.bf16.mxu0 0
      %2317 = vmatpush1.bf16.msra.mxu0 %v2157
      %2318 = vmatprep.mubr.bf16.mxu0 %v1816
      %2319 = vmatmul.mubr.bf16.gmra.mrb[0].mxu0 %v1815
      %v2320 = vpop.f32.mrb[0].mxu0
      %v2321 = vadd.f32 %v2281, %v2320
      %v2322 = vpop.f32.mrb[0].mxu0
      %v2323 = vpop.f32.mrb[0].mxu0
      %v2324 = vpop.f32.mrb[0].mxu0
      %2325 = vdwg.mxu0
      %v2326 = vmax.f32 %v2321, 0.0
      %vm2327 = vcmask 1043456
      %v2328 = vsel %vm2327, %v2326, -inf
      %v2329 = vrot.slane %v2328, 4
      %v2330 = vmax.f32 %v2328, %v2329
      %v2331 = vrot.slane %v2330, 2
      %v2332 = vmax.f32 %v2330, %v2331
      %v2333 = vrot.slane %v2332, 1
      %v2334 = vmax.f32 %v2332, %v2333
      %2335 = vst [vmem:[%s168 + $0x3] sm:$0x1] %v2334
      %p2336 = scmp.lt.s32.totalorder %s14, 1
      %s2337 = scalar_select %p2336, %s14, 1
      %s2338 = smul.addr %s2337, 4
      %s2339 = scalar_lea.vmem %s3, %s2338
      // Predicated region
      $region33: #{convnet_encoder4_forward.1} parent=31 // pred_check
        %p2340 = pneg %p100
      $region34: #{convnet_encoder4_forward.1} parent=31 // pred_check_branch
        %2342 = sbr.rel (%p2340) target = $region36
      $region35: #{convnet_encoder4_forward.1} parent=31 // pred_region
        _
      $region36: #{convnet_encoder4_forward.1} parent=31 // pred_fallthru
        _
    $region32: #{convnet_encoder4_forward.1} parent=5 // pred_fallthru
      _
    %p2343 = scmp.le.s32.totalorder 2, %s9
    // Predicated region
    $region37: #{convnet_encoder4_forward.1} parent=5 // pred_check
      %p2344 = pneg %p2343
    $region38: #{convnet_encoder4_forward.1} parent=5 // pred_check_branch
      %2346 = sbr.rel (%p2344) target = $region40
    $region39: #{convnet_encoder4_forward.1} parent=5 // pred_region
      %s2347 = ssub.s32 %s9, 2
      // Predicated region
      $region41: #{convnet_encoder4_forward.1} parent=39 // pred_check
        %p2348 = pneg %p106
      $region42: #{convnet_encoder4_forward.1} parent=39 // pred_check_branch
        %2350 = sbr.rel (%p2348) target = $region44
      $region43: #{convnet_encoder4_forward.1} parent=39 // pred_region
        %p2351 = scmp.lt.s32.totalorder %s15, 1
        %s2352 = scalar_select %p2351, %s15, 1
        %s2353 = smul.addr %s2352, 4
        %s2354 = scalar_lea.vmem %s3, %s2353
      $region44: #{convnet_encoder4_forward.1} parent=39 // pred_fallthru
        _
    $region40: #{convnet_encoder4_forward.1} parent=5 // pred_fallthru
      _
  $region6: #{convnet_encoder4_forward.1} parent=0 // loop_footer
    %s13 = sadd.s32 1, %s9
  $region7: #{convnet_encoder4_forward.1} parent=0 // loop_footer_branch
    %8 = sbr.rel target = $region3
  $region8: #{convnet_encoder4_forward.1} parent=0 // loop_exit
    _

</llo_original>
